<compile_context>
chip_gen: v7x
topology: tpu7x:2x2x1
jax: 0.10.0
libtpu: 0.0.40
codegen_flags: <defaults>
</compile_context>

<pallas_src>
import math
import functools

import jax
import jax.numpy as jnp
from jax.experimental import pallas as pl
from jax.experimental.pallas import tpu as pltpu


def _imha_kernel(q_ref, k_ref, v_ref,
                 wq_ref, bq_ref, wk_ref, bk_ref,
                 wv_ref, bv_ref, wh_ref,
                 out_ref, attn_ref,
                 *, batch, groups, n_head, d_k):
    """One grid step == one block of query time-steps (all heads fused).

    q_ref            : (B*G, Tq, D)      query block
    k_ref, v_ref     : (B*G, T,  D)      all keys / values (resident)
    wq_ref, wk_ref   : (D, H*d_k)        fused per-head projections
    bq_ref, bk_ref   : (1, H*d_k)
    wv_ref, bv_ref   : (D, d_v), (1, d_v)  shared value projection
    wh_ref           : (d_v, D)          final output projection (bias-free)
    out_ref          : (B*G, Tq, D)
    attn_ref         : (B*G, Tq, H*T)    head-major flattened attention weights
    """
    BG, TQ, D = q_ref.shape
    S = k_ref.shape[1]
    d_v = wv_ref.shape[1]

    q = q_ref[...].reshape(BG * TQ, D)
    k = k_ref[...].reshape(BG * S, D)
    v = v_ref[...].reshape(BG * S, D)

    inv_scale = jnp.float32(1.0 / math.sqrt(d_k))

    # Fused, lane-dense projections: one (rows, D) @ (D, H*d_k) matmul covers
    # every head.  1/sqrt(d_k) is folded into Q once; value projection is
    # head-independent -> done once.
    qs_all = (jnp.dot(q, wq_ref[...], preferred_element_type=jnp.float32)
              + bq_ref[...]) * inv_scale
    ks_all = jnp.dot(k, wk_ref[...], preferred_element_type=jnp.float32) + bk_ref[...]
    vs = jnp.dot(v, wv_ref[...], preferred_element_type=jnp.float32) + bv_ref[...]

    qs_all = qs_all.reshape(BG, TQ, D)
    ks_all = ks_all.reshape(BG, S, D)
    vs = vs.reshape(BG, S, d_v)

    # Per-head scores from static lane slices; concatenated head-major along
    # the lane axis into one (BG, TQ, H*S) slab.
    scores = []
    for h in range(n_head):                       # static, unrolled (n_head small)
        lo = h * d_k
        qh = qs_all[:, :, lo:lo + d_k]            # (BG, TQ, d_k)
        kh = ks_all[:, :, lo:lo + d_k]            # (BG, S,  d_k)
        scores.append(jnp.einsum('btk,bsk->bts', qh, kh,
                                 preferred_element_type=jnp.float32))
    scores_all = jnp.concatenate(scores, axis=-1)  # (BG, TQ, H*S)

    # nn.Softmax(dim=0): normalize over the *batch* axis.  The reduction is
    # per-element along (g, t, s, head), so one pass covers all heads.
    s4 = scores_all.reshape(batch, groups, TQ, n_head * S)
    m = jnp.max(s4, axis=0, keepdims=True)
    e = jnp.exp(s4 - m)
    rcp = 1.0 / jnp.sum(e, axis=0, keepdims=True)        # reciprocal once, reused
    attn_all = (e * rcp).reshape(BG, TQ, n_head * S)

    # Single fully lane-dense store of all heads' attention weights.
    attn_ref[...] = attn_all

    # mean_h(attn_h @ V) == (mean_h attn_h) @ V  (value projection is shared).
    attn_sum = attn_all[:, :, 0:S]
    for h in range(1, n_head):
        attn_sum = attn_sum + attn_all[:, :, h * S:(h + 1) * S]
    acc = jnp.einsum('bts,bsd->btd', attn_sum, vs,
                     preferred_element_type=jnp.float32)
    mean = acc * jnp.float32(1.0 / n_head)

    out = jnp.dot(mean.reshape(BG * TQ, d_v), wh_ref[...],
                  preferred_element_type=jnp.float32)    # w_h (bias-free)
    out_ref[...] = out.reshape(BG, TQ, D)


def interpretable_mha(q, k, v, params, *, mask=None, block_t=None):
    """Pallas implementation of InterpretableMultiHeadAttention.forward.

    Returns (outputs, attn) with
      outputs : (B, G, T, d_model)
      attn    : (B, G, T, T, n_head)
    """
    assert mask is None  # TODO(synk): mask support not implemented
    B, G, T, D = q.shape
    H, d_k, _ = params['wq'].shape
    d_v = params['wv'].shape[0]
    BG = B * G

    # Free (metadata-only) flattening of the leading dims.
    qf = q.reshape(BG, T, D)
    kf = k.reshape(BG, T, D)
    vf = v.reshape(BG, T, D)

    # Fuse the per-head projection weights into single lane-dense matrices:
    # column block h*d_k:(h+1)*d_k of wq_all == params['wq'][h].T
    wq_all = jnp.transpose(params['wq'], (2, 0, 1)).reshape(D, H * d_k)
    wk_all = jnp.transpose(params['wk'], (2, 0, 1)).reshape(D, H * d_k)
    bq_all = params['bq'].reshape(1, H * d_k)
    bk_all = params['bk'].reshape(1, H * d_k)
    wv_t = params['wv'].T                          # (D, d_v)
    bv = params['bv'].reshape(1, d_v)
    wh_t = params['wh'].T                          # (d_v, D)

    if block_t is None:
        block_t = next((c for c in (128, 64, 32, 16, 8) if T % c == 0), T)
    block_t = min(block_t, T)
    assert T % block_t == 0
    grid = (T // block_t,)

    kernel = functools.partial(_imha_kernel, batch=B, groups=G,
                               n_head=H, d_k=d_k)

    out, attn_flat = pl.pallas_call(
        kernel,
        out_shape=(
            jax.ShapeDtypeStruct((BG, T, D), jnp.float32),
            jax.ShapeDtypeStruct((BG, T, H * T), jnp.float32),
        ),
        grid_spec=pltpu.PrefetchScalarGridSpec(
            num_scalar_prefetch=0,
            grid=grid,
            in_specs=[
                pl.BlockSpec((BG, block_t, D), lambda t: (0, t, 0)),   # q (tiled over query time)
                pl.BlockSpec((BG, T, D), lambda t: (0, 0, 0)),         # k (all keys)
                pl.BlockSpec((BG, T, D), lambda t: (0, 0, 0)),         # v
                pl.BlockSpec((D, H * d_k), lambda t: (0, 0)),          # wq fused
                pl.BlockSpec((1, H * d_k), lambda t: (0, 0)),          # bq fused
                pl.BlockSpec((D, H * d_k), lambda t: (0, 0)),          # wk fused
                pl.BlockSpec((1, H * d_k), lambda t: (0, 0)),          # bk fused
                pl.BlockSpec((D, d_v), lambda t: (0, 0)),              # wv
                pl.BlockSpec((1, d_v), lambda t: (0, 0)),              # bv
                pl.BlockSpec((d_v, D), lambda t: (0, 0)),              # wh
            ],
            out_specs=[
                pl.BlockSpec((BG, block_t, D), lambda t: (0, t, 0)),       # outputs
                pl.BlockSpec((BG, block_t, H * T), lambda t: (0, t, 0)),   # attn (lane-dense)
            ],
        ),
        compiler_params=pltpu.CompilerParams(
            dimension_semantics=("parallel",),
            vmem_limit_bytes=32 * 1024 * 1024),
    )(qf, kf, vf, wq_all, bq_all, wk_all, bk_all, wv_t, bv, wh_t)

    outputs = out.reshape(B, G, T, D)
    # (BG, T, H*T) -> (B, G, T, H, T) is a free reshape; the only remaining
    # data-moving permute is the swap of the two small trailing axes to match
    # torch.stack(attns, dim=-1) -> (B, G, T, T, H).
    attn = jnp.swapaxes(attn_flat.reshape(B, G, T, H, T), -1, -2)
    return outputs, attn


def _reference(q, k, v, params):
    """Plain-JAX transcription of the PyTorch forward (for verification)."""
    n_head = params['wq'].shape[0]
    d_k = params['wq'].shape[1]
    vs = v @ params['wv'].T + params['bv']
    heads, attns = [], []
    for i in range(n_head):
        qs = q @ params['wq'][i].T + params['bq'][i]
        ks = k @ params['wk'][i].T + params['bk'][i]
        scores = jnp.einsum('bgtd,bgsd->bgts', qs, ks) / jnp.sqrt(jnp.float32(d_k))
        attn = jax.nn.softmax(scores, axis=0)   # nn.Softmax(dim=0)
        heads.append(jnp.einsum('bgts,bgsd->bgtd', attn, vs))
        attns.append(attn)
    head = jnp.stack(heads, axis=-1)
    attn = jnp.stack(attns, axis=-1)
    outputs = jnp.mean(head, axis=-1) @ params['wh'].T
    return outputs, attn


if __name__ == "__main__":
    # Small shapes consistent with the module's 4-D usage.
    B, G, T = 2, 2, 8
    n_head, d_model = 4, 32
    d_k = d_v = d_model // n_head

    key = jax.random.PRNGKey(0)
    ks_ = jax.random.split(key, 10)
    q = jax.random.normal(ks_[0], (B, G, T, d_model), jnp.float32)
    k = jax.random.normal(ks_[1], (B, G, T, d_model), jnp.float32)
    v = jax.random.normal(ks_[2], (B, G, T, d_model), jnp.float32)

    s = 1.0 / math.sqrt(d_model)
    params = {
        'wq': jax.random.normal(ks_[3], (n_head, d_k, d_model), jnp.float32) * s,
        'bq': jax.random.normal(ks_[4], (n_head, d_k), jnp.float32) * 0.1,
        'wk': jax.random.normal(ks_[5], (n_head, d_k, d_model), jnp.float32) * s,
        'bk': jax.random.normal(ks_[6], (n_head, d_k), jnp.float32) * 0.1,
        'wv': jax.random.normal(ks_[7], (d_v, d_model), jnp.float32) * s,
        'bv': jax.random.normal(ks_[8], (d_v,), jnp.float32) * 0.1,
        'wh': jax.random.normal(ks_[9], (d_model, d_v), jnp.float32) * (1.0 / math.sqrt(d_v)),
    }

    out, attn = jax.jit(functools.partial(interpretable_mha, params=params))(q, k, v)
    out = jax.block_until_ready(out)
    attn = jax.block_until_ready(attn)

    ref_out, ref_attn = _reference(q, k, v, params)
    assert out.shape == (B, G, T, d_model) and attn.shape == (B, G, T, T, n_head)
    assert jnp.allclose(out, ref_out, atol=1e-5, rtol=1e-5)
    assert jnp.allclose(attn, ref_attn, atol=1e-5, rtol=1e-5)

    print("KERNEL_OK")
</pallas_src>

<mosaic_0001>
module attributes {stable_mosaic.version = 11 : i64} {
  func.func @_imha_kernel(%arg0: i32, %arg1: memref<4x8x32xf32, #tpu.memory_space<vmem>>, %arg2: memref<4x8x32xf32, #tpu.memory_space<vmem>>, %arg3: memref<4x8x32xf32, #tpu.memory_space<vmem>>, %arg4: memref<32x32xf32, #tpu.memory_space<vmem>>, %arg5: memref<1x32xf32, #tpu.memory_space<vmem>>, %arg6: memref<32x32xf32, #tpu.memory_space<vmem>>, %arg7: memref<1x32xf32, #tpu.memory_space<vmem>>, %arg8: memref<32x8xf32, #tpu.memory_space<vmem>>, %arg9: memref<1x8xf32, #tpu.memory_space<vmem>>, %arg10: memref<8x32xf32, #tpu.memory_space<vmem>>, %arg11: memref<4x8x32xf32, #tpu.memory_space<vmem>>, %arg12: memref<4x8x32xf32, #tpu.memory_space<vmem>>) attributes {dimension_semantics = [#tpu.dimension_semantics<parallel>], iteration_bounds = array<i64: 1>, scalar_prefetch = 0 : i64, scratch_operands = 0 : i64, tpu.core_type = #tpu.core_type<tc>, window_params = [{transform_indices = @transform_0, window_bounds = array<i64: 4, 8, 32>}, {pipeline_mode = #tpu.pipeline_mode<synchronous>, transform_indices = @transform_1, window_bounds = array<i64: 4, 8, 32>}, {pipeline_mode = #tpu.pipeline_mode<synchronous>, transform_indices = @transform_2, window_bounds = array<i64: 4, 8, 32>}, {pipeline_mode = #tpu.pipeline_mode<synchronous>, transform_indices = @transform_3, window_bounds = array<i64: 32, 32>}, {pipeline_mode = #tpu.pipeline_mode<synchronous>, transform_indices = @transform_4, window_bounds = array<i64: 1, 32>}, {pipeline_mode = #tpu.pipeline_mode<synchronous>, transform_indices = @transform_5, window_bounds = array<i64: 32, 32>}, {pipeline_mode = #tpu.pipeline_mode<synchronous>, transform_indices = @transform_6, window_bounds = array<i64: 1, 32>}, {pipeline_mode = #tpu.pipeline_mode<synchronous>, transform_indices = @transform_7, window_bounds = array<i64: 32, 8>}, {pipeline_mode = #tpu.pipeline_mode<synchronous>, transform_indices = @transform_8, window_bounds = array<i64: 1, 8>}, {pipeline_mode = #tpu.pipeline_mode<synchronous>, transform_indices = @transform_9, window_bounds = array<i64: 8, 32>}, {transform_indices = @transform_10, window_bounds = array<i64: 4, 8, 32>}, {transform_indices = @transform_11, window_bounds = array<i64: 4, 8, 32>}]} {
    %c0 = arith.constant 0 : index
    %c0_0 = arith.constant 0 : index
    %c0_1 = arith.constant 0 : index
    %0 = vector.load %arg1[%c0, %c0_0, %c0_1] : memref<4x8x32xf32, #tpu.memory_space<vmem>>, vector<4x8x32xf32>
    %1 = vector.shape_cast %0 : vector<4x8x32xf32> to vector<32x32xf32>
    %c0_2 = arith.constant 0 : index
    %c0_3 = arith.constant 0 : index
    %c0_4 = arith.constant 0 : index
    %2 = vector.load %arg2[%c0_2, %c0_3, %c0_4] : memref<4x8x32xf32, #tpu.memory_space<vmem>>, vector<4x8x32xf32>
    %3 = vector.shape_cast %2 : vector<4x8x32xf32> to vector<32x32xf32>
    %c0_5 = arith.constant 0 : index
    %c0_6 = arith.constant 0 : index
    %c0_7 = arith.constant 0 : index
    %4 = vector.load %arg3[%c0_5, %c0_6, %c0_7] : memref<4x8x32xf32, #tpu.memory_space<vmem>>, vector<4x8x32xf32>
    %5 = vector.shape_cast %4 : vector<4x8x32xf32> to vector<32x32xf32>
    %c0_8 = arith.constant 0 : index
    %c0_9 = arith.constant 0 : index
    %6 = vector.load %arg4[%c0_8, %c0_9] : memref<32x32xf32, #tpu.memory_space<vmem>>, vector<32x32xf32>
    %cst = arith.constant dense<0.000000e+00> : vector<32x32xf32>
    %7 = tpu.matmul %1, %6, %cst {dimension_numbers = #tpu.dot_dimension_numbers<[1], [0], [0], [1], [0, 0, 1, 1], [], []>} : vector<32x32xf32>, vector<32x32xf32>, vector<32x32xf32> -> vector<32x32xf32>
    %c0_10 = arith.constant 0 : index
    %c0_11 = arith.constant 0 : index
    %8 = vector.load %arg5[%c0_10, %c0_11] : memref<1x32xf32, #tpu.memory_space<vmem>>, vector<1x32xf32>
    %9 = vector.broadcast %8 : vector<1x32xf32> to vector<32x32xf32>
    %10 = arith.addf %7, %9 : vector<32x32xf32>
    %cst_12 = arith.constant 0.353553385 : f32
    %11 = vector.broadcast %cst_12 : f32 to vector<32x32xf32>
    %12 = arith.mulf %10, %11 : vector<32x32xf32>
    %c0_13 = arith.constant 0 : index
    %c0_14 = arith.constant 0 : index
    %13 = vector.load %arg6[%c0_13, %c0_14] : memref<32x32xf32, #tpu.memory_space<vmem>>, vector<32x32xf32>
    %cst_15 = arith.constant dense<0.000000e+00> : vector<32x32xf32>
    %14 = tpu.matmul %3, %13, %cst_15 {dimension_numbers = #tpu.dot_dimension_numbers<[1], [0], [0], [1], [0, 0, 1, 1], [], []>} : vector<32x32xf32>, vector<32x32xf32>, vector<32x32xf32> -> vector<32x32xf32>
    %c0_16 = arith.constant 0 : index
    %c0_17 = arith.constant 0 : index
    %15 = vector.load %arg7[%c0_16, %c0_17] : memref<1x32xf32, #tpu.memory_space<vmem>>, vector<1x32xf32>
    %16 = vector.broadcast %15 : vector<1x32xf32> to vector<32x32xf32>
    %17 = arith.addf %14, %16 : vector<32x32xf32>
    %c0_18 = arith.constant 0 : index
    %c0_19 = arith.constant 0 : index
    %18 = vector.load %arg8[%c0_18, %c0_19] : memref<32x8xf32, #tpu.memory_space<vmem>>, vector<32x8xf32>
    %cst_20 = arith.constant dense<0.000000e+00> : vector<32x8xf32>
    %19 = tpu.matmul %5, %18, %cst_20 {dimension_numbers = #tpu.dot_dimension_numbers<[1], [0], [0], [1], [0, 0, 1, 1], [], []>} : vector<32x32xf32>, vector<32x8xf32>, vector<32x8xf32> -> vector<32x8xf32>
    %c0_21 = arith.constant 0 : index
    %c0_22 = arith.constant 0 : index
    %20 = vector.load %arg9[%c0_21, %c0_22] : memref<1x8xf32, #tpu.memory_space<vmem>>, vector<1x8xf32>
    %21 = vector.broadcast %20 : vector<1x8xf32> to vector<32x8xf32>
    %22 = arith.addf %19, %21 : vector<32x8xf32>
    %23 = vector.shape_cast %12 : vector<32x32xf32> to vector<4x8x32xf32>
    %24 = vector.shape_cast %17 : vector<32x32xf32> to vector<4x8x32xf32>
    %25 = vector.shape_cast %22 : vector<32x8xf32> to vector<4x8x8xf32>
    %26 = vector.extract_strided_slice %23 {offsets = [0, 0, 0], sizes = [4, 8, 8], strides = [1, 1, 1]} : vector<4x8x32xf32> to vector<4x8x8xf32>
    %27 = vector.extract_strided_slice %24 {offsets = [0, 0, 0], sizes = [4, 8, 8], strides = [1, 1, 1]} : vector<4x8x32xf32> to vector<4x8x8xf32>
    "tpu.trace_start"() <{level = 10 : i32, message = "btk,bsk->bts"}> : () -> ()
    %cst_23 = arith.constant dense<0.000000e+00> : vector<4x8x8xf32>
    %28 = tpu.matmul %26, %27, %cst_23 {dimension_numbers = #tpu.dot_dimension_numbers<[2], [2], [1], [1], [0, 0, 0, 1, 1, 1], [0], [0]>} : vector<4x8x8xf32>, vector<4x8x8xf32>, vector<4x8x8xf32> -> vector<4x8x8xf32>
    "tpu.trace_stop"() : () -> ()
    %29 = vector.extract_strided_slice %23 {offsets = [0, 0, 8], sizes = [4, 8, 8], strides = [1, 1, 1]} : vector<4x8x32xf32> to vector<4x8x8xf32>
    %30 = vector.extract_strided_slice %24 {offsets = [0, 0, 8], sizes = [4, 8, 8], strides = [1, 1, 1]} : vector<4x8x32xf32> to vector<4x8x8xf32>
    "tpu.trace_start"() <{level = 10 : i32, message = "btk,bsk->bts"}> : () -> ()
    %cst_24 = arith.constant dense<0.000000e+00> : vector<4x8x8xf32>
    %31 = tpu.matmul %29, %30, %cst_24 {dimension_numbers = #tpu.dot_dimension_numbers<[2], [2], [1], [1], [0, 0, 0, 1, 1, 1], [0], [0]>} : vector<4x8x8xf32>, vector<4x8x8xf32>, vector<4x8x8xf32> -> vector<4x8x8xf32>
    "tpu.trace_stop"() : () -> ()
    %32 = vector.extract_strided_slice %23 {offsets = [0, 0, 16], sizes = [4, 8, 8], strides = [1, 1, 1]} : vector<4x8x32xf32> to vector<4x8x8xf32>
    %33 = vector.extract_strided_slice %24 {offsets = [0, 0, 16], sizes = [4, 8, 8], strides = [1, 1, 1]} : vector<4x8x32xf32> to vector<4x8x8xf32>
    "tpu.trace_start"() <{level = 10 : i32, message = "btk,bsk->bts"}> : () -> ()
    %cst_25 = arith.constant dense<0.000000e+00> : vector<4x8x8xf32>
    %34 = tpu.matmul %32, %33, %cst_25 {dimension_numbers = #tpu.dot_dimension_numbers<[2], [2], [1], [1], [0, 0, 0, 1, 1, 1], [0], [0]>} : vector<4x8x8xf32>, vector<4x8x8xf32>, vector<4x8x8xf32> -> vector<4x8x8xf32>
    "tpu.trace_stop"() : () -> ()
    %35 = vector.extract_strided_slice %23 {offsets = [0, 0, 24], sizes = [4, 8, 8], strides = [1, 1, 1]} : vector<4x8x32xf32> to vector<4x8x8xf32>
    %36 = vector.extract_strided_slice %24 {offsets = [0, 0, 24], sizes = [4, 8, 8], strides = [1, 1, 1]} : vector<4x8x32xf32> to vector<4x8x8xf32>
    "tpu.trace_start"() <{level = 10 : i32, message = "btk,bsk->bts"}> : () -> ()
    %cst_26 = arith.constant dense<0.000000e+00> : vector<4x8x8xf32>
    %37 = tpu.matmul %35, %36, %cst_26 {dimension_numbers = #tpu.dot_dimension_numbers<[2], [2], [1], [1], [0, 0, 0, 1, 1, 1], [0], [0]>} : vector<4x8x8xf32>, vector<4x8x8xf32>, vector<4x8x8xf32> -> vector<4x8x8xf32>
    "tpu.trace_stop"() : () -> ()
    %38 = tpu.concatenate %28, %31, %34, %37 in 2 : vector<4x8x8xf32>, vector<4x8x8xf32>, vector<4x8x8xf32>, vector<4x8x8xf32> -> vector<4x8x32xf32>
    %39 = vector.shape_cast %38 : vector<4x8x32xf32> to vector<2x2x8x32xf32>
    %cst_27 = arith.constant dense<0xFF800000> : vector<2x8x32xf32>
    %40 = vector.multi_reduction <maximumf>, %39, %cst_27 [0] : vector<2x2x8x32xf32> to vector<2x8x32xf32>
    %41 = vector.shape_cast %40 : vector<2x8x32xf32> to vector<1x2x8x32xf32>
    %42 = vector.broadcast %41 : vector<1x2x8x32xf32> to vector<2x2x8x32xf32>
    %43 = arith.subf %39, %42 : vector<2x2x8x32xf32>
    %44 = math.exp %43 : vector<2x2x8x32xf32>
    %cst_28 = arith.constant dense<0.000000e+00> : vector<2x8x32xf32>
    %45 = vector.multi_reduction <add>, %44, %cst_28 [0] : vector<2x2x8x32xf32> to vector<2x8x32xf32>
    %46 = vector.shape_cast %45 : vector<2x8x32xf32> to vector<1x2x8x32xf32>
    %cst_29 = arith.constant 1.000000e+00 : f32
    %47 = vector.broadcast %cst_29 : f32 to vector<1x2x8x32xf32>
    %48 = arith.divf %47, %46 : vector<1x2x8x32xf32>
    %49 = vector.broadcast %48 : vector<1x2x8x32xf32> to vector<2x2x8x32xf32>
    %50 = arith.mulf %44, %49 : vector<2x2x8x32xf32>
    %51 = vector.shape_cast %50 : vector<2x2x8x32xf32> to vector<4x8x32xf32>
    %c0_30 = arith.constant 0 : index
    %c0_31 = arith.constant 0 : index
    %c0_32 = arith.constant 0 : index
    %52 = vector.load %arg12[%c0_30, %c0_31, %c0_32] : memref<4x8x32xf32, #tpu.memory_space<vmem>>, vector<4x8x32xf32>
    tpu.vector_store %arg12[%c0_30, %c0_31, %c0_32], %51 {strides = array<i32>} : memref<4x8x32xf32, #tpu.memory_space<vmem>>, vector<4x8x32xf32>,
    %53 = vector.extract_strided_slice %51 {offsets = [0, 0, 0], sizes = [4, 8, 8], strides = [1, 1, 1]} : vector<4x8x32xf32> to vector<4x8x8xf32>
    %54 = vector.extract_strided_slice %51 {offsets = [0, 0, 8], sizes = [4, 8, 8], strides = [1, 1, 1]} : vector<4x8x32xf32> to vector<4x8x8xf32>
    %55 = arith.addf %53, %54 : vector<4x8x8xf32>
    %56 = vector.extract_strided_slice %51 {offsets = [0, 0, 16], sizes = [4, 8, 8], strides = [1, 1, 1]} : vector<4x8x32xf32> to vector<4x8x8xf32>
    %57 = arith.addf %55, %56 : vector<4x8x8xf32>
    %58 = vector.extract_strided_slice %51 {offsets = [0, 0, 24], sizes = [4, 8, 8], strides = [1, 1, 1]} : vector<4x8x32xf32> to vector<4x8x8xf32>
    %59 = arith.addf %57, %58 : vector<4x8x8xf32>
    "tpu.trace_start"() <{level = 10 : i32, message = "bts,bsd->btd"}> : () -> ()
    %cst_33 = arith.constant dense<0.000000e+00> : vector<4x8x8xf32>
    %60 = tpu.matmul %59, %25, %cst_33 {dimension_numbers = #tpu.dot_dimension_numbers<[2], [1], [1], [2], [0, 0, 0, 1, 1, 2], [0], [0]>} : vector<4x8x8xf32>, vector<4x8x8xf32>, vector<4x8x8xf32> -> vector<4x8x8xf32>
    "tpu.trace_stop"() : () -> ()
    %cst_34 = arith.constant 2.500000e-01 : f32
    %61 = vector.broadcast %cst_34 : f32 to vector<4x8x8xf32>
    %62 = arith.mulf %60, %61 : vector<4x8x8xf32>
    %63 = vector.shape_cast %62 : vector<4x8x8xf32> to vector<32x8xf32>
    %c0_35 = arith.constant 0 : index
    %c0_36 = arith.constant 0 : index
    %64 = vector.load %arg10[%c0_35, %c0_36] : memref<8x32xf32, #tpu.memory_space<vmem>>, vector<8x32xf32>
    %cst_37 = arith.constant dense<0.000000e+00> : vector<32x32xf32>
    %65 = tpu.matmul %63, %64, %cst_37 {dimension_numbers = #tpu.dot_dimension_numbers<[1], [0], [0], [1], [0, 0, 1, 1], [], []>} : vector<32x8xf32>, vector<8x32xf32>, vector<32x32xf32> -> vector<32x32xf32>
    %66 = vector.shape_cast %65 : vector<32x32xf32> to vector<4x8x32xf32>
    %c0_38 = arith.constant 0 : index
    %c0_39 = arith.constant 0 : index
    %c0_40 = arith.constant 0 : index
    %67 = vector.load %arg11[%c0_38, %c0_39, %c0_40] : memref<4x8x32xf32, #tpu.memory_space<vmem>>, vector<4x8x32xf32>
    tpu.vector_store %arg11[%c0_38, %c0_39, %c0_40], %66 {strides = array<i32>} : memref<4x8x32xf32, #tpu.memory_space<vmem>>, vector<4x8x32xf32>,
    return
  }
  func.func @transform_0(%arg0: i32) -> (i32, i32, i32) {
    %c0_i32 = arith.constant 0 : i32
    %c0_i32_0 = arith.constant 0 : i32
    %c0_i32_1 = arith.constant 0 : i32
    return %c0_i32, %arg0, %c0_i32_0 : i32, i32, i32
  }
  func.func @transform_1(%arg0: i32) -> (i32, i32, i32) {
    %c0_i32 = arith.constant 0 : i32
    %c0_i32_0 = arith.constant 0 : i32
    %c0_i32_1 = arith.constant 0 : i32
    %c0_i32_2 = arith.constant 0 : i32
    return %c0_i32, %c0_i32_0, %c0_i32_1 : i32, i32, i32
  }
  func.func @transform_2(%arg0: i32) -> (i32, i32, i32) {
    %c0_i32 = arith.constant 0 : i32
    %c0_i32_0 = arith.constant 0 : i32
    %c0_i32_1 = arith.constant 0 : i32
    %c0_i32_2 = arith.constant 0 : i32
    return %c0_i32, %c0_i32_0, %c0_i32_1 : i32, i32, i32
  }
  func.func @transform_3(%arg0: i32) -> (i32, i32) {
    %c0_i32 = arith.constant 0 : i32
    %c0_i32_0 = arith.constant 0 : i32
    %c0_i32_1 = arith.constant 0 : i32
    return %c0_i32, %c0_i32_0 : i32, i32
  }
  func.func @transform_4(%arg0: i32) -> (i32, i32) {
    %c0_i32 = arith.constant 0 : i32
    %c0_i32_0 = arith.constant 0 : i32
    %c0_i32_1 = arith.constant 0 : i32
    return %c0_i32, %c0_i32_0 : i32, i32
  }
  func.func @transform_5(%arg0: i32) -> (i32, i32) {
    %c0_i32 = arith.constant 0 : i32
    %c0_i32_0 = arith.constant 0 : i32
    %c0_i32_1 = arith.constant 0 : i32
    return %c0_i32, %c0_i32_0 : i32, i32
  }
  func.func @transform_6(%arg0: i32) -> (i32, i32) {
    %c0_i32 = arith.constant 0 : i32
    %c0_i32_0 = arith.constant 0 : i32
    %c0_i32_1 = arith.constant 0 : i32
    return %c0_i32, %c0_i32_0 : i32, i32
  }
  func.func @transform_7(%arg0: i32) -> (i32, i32) {
    %c0_i32 = arith.constant 0 : i32
    %c0_i32_0 = arith.constant 0 : i32
    %c0_i32_1 = arith.constant 0 : i32
    return %c0_i32, %c0_i32_0 : i32, i32
  }
  func.func @transform_8(%arg0: i32) -> (i32, i32) {
    %c0_i32 = arith.constant 0 : i32
    %c0_i32_0 = arith.constant 0 : i32
    %c0_i32_1 = arith.constant 0 : i32
    return %c0_i32, %c0_i32_0 : i32, i32
  }
  func.func @transform_9(%arg0: i32) -> (i32, i32) {
    %c0_i32 = arith.constant 0 : i32
    %c0_i32_0 = arith.constant 0 : i32
    %c0_i32_1 = arith.constant 0 : i32
    return %c0_i32, %c0_i32_0 : i32, i32
  }
  func.func @transform_10(%arg0: i32) -> (i32, i32, i32) {
    %c0_i32 = arith.constant 0 : i32
    %c0_i32_0 = arith.constant 0 : i32
    %c0_i32_1 = arith.constant 0 : i32
    return %c0_i32, %arg0, %c0_i32_0 : i32, i32, i32
  }
  func.func @transform_11(%arg0: i32) -> (i32, i32, i32) {
    %c0_i32 = arith.constant 0 : i32
    %c0_i32_0 = arith.constant 0 : i32
    %c0_i32_1 = arith.constant 0 : i32
    return %c0_i32, %arg0, %c0_i32_0 : i32, i32, i32
  }
}

</mosaic_0001>

<llo_original>
// kernel: interpretable_mha.1
$region0: #{interpretable_mha.1}
  #allocation0 [shape = 'u32[]', space=smem, size = 0x4, offset = 0x4, fixed_abs, tag = 'smem constant byte address 0x4 - core index']
  #allocation1 [shape = 'u32[144,128]{1,0:T(1,128)}', space=vmem, size = 0x12000, scoped, tag = 'internal scratch']
  %s0 = inlined_call_operand.hbm [shape: f32[4,8,32], index: 0, kind: input, shape index: {}]
  %s1 = inlined_call_operand.hbm [shape: f32[4,8,32], index: 1, kind: input, shape index: {}]
  %s2 = inlined_call_operand.hbm [shape: f32[4,8,32], index: 2, kind: input, shape index: {}]
  %s3 = inlined_call_operand.vmem [shape: f32[32,32], index: 3, kind: input, shape index: {}]
  %s4 = inlined_call_operand.vmem [shape: f32[1,32], index: 4, kind: input, shape index: {}]
  %s5 = inlined_call_operand.hbm [shape: f32[32,32], index: 5, kind: input, shape index: {}]
  %s6 = inlined_call_operand.vmem [shape: f32[1,32], index: 6, kind: input, shape index: {}]
  %s7 = inlined_call_operand.hbm [shape: f32[32,8], index: 7, kind: input, shape index: {}]
  %s8 = inlined_call_operand.vmem [shape: f32[1,8], index: 8, kind: input, shape index: {}]
  %s9 = inlined_call_operand.vmem [shape: f32[8,32], index: 9, kind: input, shape index: {}]
  %s10 = inlined_call_operand.hbm [shape: f32[4,8,32], index: 10, kind: output, shape index: {0}]
  %s11 = inlined_call_operand.vmem [shape: f32[4,8,32], index: 11, kind: output, shape index: {1}]
  %12 = xla_tuple %s10, %s11
  %s13 = sld [smem:[#allocation0]]
  $region78: #{interpretable_mha.1} parent=0
    _
  %s15 = ssub.s32 1, %s13
  %s16 = scalar_select 0, %s15, %s13
  $region1: #{interpretable_mha.1} parent=0
    #allocation2 [shape = 'u8[16384]{0}', space=vmem, size = 0x4000, scoped, tag = 'input window, operand 0, single buffered']
    #allocation3 [shape = 's32[1]{0}', space=sflag, size = 0x4, scoped, tag = 'scoped memory for interpretable_mha.1']
    #allocation4 [shape = 's32[1]{0}', space=sflag, size = 0x4, scoped, tag = 'scoped memory for interpretable_mha.1']
    #allocation5 [shape = 'u8[16384]{0}', space=vmem, size = 0x4000, scoped, tag = 'input window, operand 1, single buffered']
    #allocation6 [shape = 's32[1]{0}', space=sflag, size = 0x4, scoped, tag = 'scoped memory for interpretable_mha.1']
    #allocation7 [shape = 'u8[16384]{0}', space=vmem, size = 0x4000, scoped, tag = 'input window, operand 2, single buffered']
    #allocation8 [shape = 'u8[16384]{0}', space=vmem, size = 0x4000, scoped, tag = 'input window, operand 5, single buffered']
    #allocation9 [shape = 's32[1]{0}', space=sflag, size = 0x4, scoped, tag = 'scoped memory for interpretable_mha.1']
    #allocation10 [shape = 'u8[16384]{0}', space=vmem, size = 0x4000, scoped, tag = 'input window, operand 7, single buffered']
    #allocation11 [shape = 'u8[16384]{0}', space=vmem, size = 0x4000, scoped, tag = 'output window, operand 0, single buffered']
    %17 = vsyncpa [#allocation3], 0
    %18 = vsyncpa [#allocation6], 0
    %19 = vsyncpa [#allocation9], 0
    %20 = vsyncpa [#allocation4], 0
    // Predicated region
    $region2: #{interpretable_mha.1} parent=1 // pred_check
      _
    $region3: #{interpretable_mha.1} parent=1 // pred_check_branch
      %22 = sbr.rel (0) target = $region5
    $region4: #{interpretable_mha.1} parent=1 // pred_region
      %s24 = ssub.s32 512, 512
      %25 = vsyncadd [#allocation3], %s24
      %s26 = sshll.u32 [#allocation2], 4
      %s27 = int_to_ptr.vmem [resolvable:$true] %s26
      %32 = dma.hbm_to_vmem [thread:$0]  %s0, 512, %s27, [#allocation3], 128, 128, 8
    $region5: #{interpretable_mha.1} parent=1 // pred_fallthru
      _
    // Predicated region
    $region6: #{interpretable_mha.1} parent=1 // pred_check
      _
    $region7: #{interpretable_mha.1} parent=1 // pred_check_branch
      %34 = sbr.rel (0) target = $region9
    $region8: #{interpretable_mha.1} parent=1 // pred_region
      %s36 = ssub.s32 512, 512
      %37 = vsyncadd [#allocation6], %s36
      %s38 = sshll.u32 [#allocation5], 4
      %s39 = int_to_ptr.vmem [resolvable:$true] %s38
      %44 = dma.hbm_to_vmem [thread:$0]  %s1, 512, %s39, [#allocation6], 128, 128, 8
    $region9: #{interpretable_mha.1} parent=1 // pred_fallthru
      _
    // Predicated region
    $region10: #{interpretable_mha.1} parent=1 // pred_check
      _
    $region11: #{interpretable_mha.1} parent=1 // pred_check_branch
      %46 = sbr.rel (0) target = $region13
    $region12: #{interpretable_mha.1} parent=1 // pred_region
      %s48 = ssub.s32 512, 512
      %49 = vsyncadd [#allocation6], %s48
      %s50 = sshll.u32 [#allocation7], 4
      %s51 = int_to_ptr.vmem [resolvable:$true] %s50
      %56 = dma.hbm_to_vmem [thread:$0]  %s2, 512, %s51, [#allocation6], 128, 128, 8
    $region13: #{interpretable_mha.1} parent=1 // pred_fallthru
      _
    // Predicated region
    $region14: #{interpretable_mha.1} parent=1 // pred_check
      _
    $region15: #{interpretable_mha.1} parent=1 // pred_check_branch
      %58 = sbr.rel (0) target = $region17
    $region16: #{interpretable_mha.1} parent=1 // pred_region
      _
    $region17: #{interpretable_mha.1} parent=1 // pred_fallthru
      _
    // Predicated region
    $region18: #{interpretable_mha.1} parent=1 // pred_check
      _
    $region19: #{interpretable_mha.1} parent=1 // pred_check_branch
      %60 = sbr.rel (0) target = $region21
    $region20: #{interpretable_mha.1} parent=1 // pred_region
      _
    $region21: #{interpretable_mha.1} parent=1 // pred_fallthru
      _
    // Predicated region
    $region22: #{interpretable_mha.1} parent=1 // pred_check
      _
    $region23: #{interpretable_mha.1} parent=1 // pred_check_branch
      %62 = sbr.rel (0) target = $region25
    $region24: #{interpretable_mha.1} parent=1 // pred_region
      %s64 = ssub.s32 512, 512
      %65 = vsyncadd [#allocation9], %s64
      %s66 = sshll.u32 [#allocation8], 4
      %s67 = int_to_ptr.vmem [resolvable:$true] %s66
      %72 = dma.hbm_to_vmem [thread:$0]  %s5, 512, %s67, [#allocation9], 128, 128, 8
    $region25: #{interpretable_mha.1} parent=1 // pred_fallthru
      _
    // Predicated region
    $region26: #{interpretable_mha.1} parent=1 // pred_check
      _
    $region27: #{interpretable_mha.1} parent=1 // pred_check_branch
      %74 = sbr.rel (0) target = $region29
    $region28: #{interpretable_mha.1} parent=1 // pred_region
      _
    $region29: #{interpretable_mha.1} parent=1 // pred_fallthru
      _
    // Predicated region
    $region30: #{interpretable_mha.1} parent=1 // pred_check
      _
    $region31: #{interpretable_mha.1} parent=1 // pred_check_branch
      %76 = sbr.rel (0) target = $region33
    $region32: #{interpretable_mha.1} parent=1 // pred_region
      %s78 = ssub.s32 512, 512
      %79 = vsyncadd [#allocation9], %s78
      %s80 = sshll.u32 [#allocation10], 4
      %s81 = int_to_ptr.vmem [resolvable:$true] %s80
      %86 = dma.hbm_to_vmem [thread:$0]  %s7, 512, %s81, [#allocation9], 128, 128, 8
    $region33: #{interpretable_mha.1} parent=1 // pred_fallthru
      _
    // Predicated region
    $region34: #{interpretable_mha.1} parent=1 // pred_check
      _
    $region35: #{interpretable_mha.1} parent=1 // pred_check_branch
      %88 = sbr.rel (0) target = $region37
    $region36: #{interpretable_mha.1} parent=1 // pred_region
      _
    $region37: #{interpretable_mha.1} parent=1 // pred_fallthru
      _
    // Predicated region
    $region38: #{interpretable_mha.1} parent=1 // pred_check
      _
    $region39: #{interpretable_mha.1} parent=1 // pred_check_branch
      %90 = sbr.rel (0) target = $region41
    $region40: #{interpretable_mha.1} parent=1 // pred_region
      _
    $region41: #{interpretable_mha.1} parent=1 // pred_fallthru
      _
    // Predicated region
    $region42: #{interpretable_mha.1} parent=1 // pred_check
      _
    $region43: #{interpretable_mha.1} parent=1 // pred_check_branch
      %92 = sbr.rel (0) target = $region45
    $region44: #{interpretable_mha.1} parent=1 // pred_region
      %93 = dma.done [#allocation3], 512
    $region45: #{interpretable_mha.1} parent=1 // pred_fallthru
      _
    // Predicated region
    $region46: #{interpretable_mha.1} parent=1 // pred_check
      _
    $region47: #{interpretable_mha.1} parent=1 // pred_check_branch
      %95 = sbr.rel (0) target = $region49
    $region48: #{interpretable_mha.1} parent=1 // pred_region
      %96 = dma.done [#allocation6], 512
    $region49: #{interpretable_mha.1} parent=1 // pred_fallthru
      _
    // Predicated region
    $region50: #{interpretable_mha.1} parent=1 // pred_check
      _
    $region51: #{interpretable_mha.1} parent=1 // pred_check_branch
      %98 = sbr.rel (0) target = $region53
    $region52: #{interpretable_mha.1} parent=1 // pred_region
      %99 = dma.done [#allocation6], 512
    $region53: #{interpretable_mha.1} parent=1 // pred_fallthru
      _
    // Predicated region
    $region54: #{interpretable_mha.1} parent=1 // pred_check
      _
    $region55: #{interpretable_mha.1} parent=1 // pred_check_branch
      %101 = sbr.rel (0) target = $region57
    $region56: #{interpretable_mha.1} parent=1 // pred_region
      %102 = dma.done [#allocation9], 512
    $region57: #{interpretable_mha.1} parent=1 // pred_fallthru
      _
    // Predicated region
    $region58: #{interpretable_mha.1} parent=1 // pred_check
      _
    $region59: #{interpretable_mha.1} parent=1 // pred_check_branch
      %104 = sbr.rel (0) target = $region61
    $region60: #{interpretable_mha.1} parent=1 // pred_region
      %105 = dma.done [#allocation9], 512
    $region61: #{interpretable_mha.1} parent=1 // pred_fallthru
      _
    %v106 = vld [vmem:[#allocation2] sm:$0xff]
    %v107 = vld [vmem:[#allocation2 + $0x8] sm:$0xff]
    %v108 = vld [vmem:[#allocation2 + $0x10] sm:$0xff]
    %v109 = vld [vmem:[#allocation2 + $0x18] sm:$0xff]
    %v110 = vld [vmem:[#allocation5] sm:$0xff]
    %v111 = vld [vmem:[#allocation5 + $0x8] sm:$0xff]
    %v112 = vld [vmem:[#allocation5 + $0x10] sm:$0xff]
    %v113 = vld [vmem:[#allocation5 + $0x18] sm:$0xff]
    %v114 = vld [vmem:[#allocation7] sm:$0xff]
    %v115 = vld [vmem:[#allocation7 + $0x8] sm:$0xff]
    %v116 = vld [vmem:[#allocation7 + $0x10] sm:$0xff]
    %v117 = vld [vmem:[#allocation7 + $0x18] sm:$0xff]
    %v118 = vld [vmem:[%s3] sm:$0xff]
    %v119 = vld [vmem:[%s3 + $0x8] sm:$0xff]
    %v120 = vld [vmem:[%s3 + $0x10] sm:$0xff]
    %v121 = vld [vmem:[%s3 + $0x18] sm:$0xff]
    %v122 = vld [vmem:[%s4] sm:$0x1]
    %v124 = vlaneseq
    %v125 = vshrl.u32 %v124, 7
    %v126 = vsub.s32 0, %v125
    %v127 = vrot.slane %v122, %v126
    %vm129 = vcmask 261120
    %v131 = vsel %vm129, %v106, 0
    %v134 = vsel %vm129, %v107, 0
    %v137 = vsel %vm129, %v108, 0
    %v140 = vsel %vm129, %v109, 0
    %142 = vmatprep.subr.mxu0 0.0
    %143 = vmatpush1.msra.mxu0 %v118
    %144 = vmatprep.subr.mxu0 0.0
    %145 = vmatpush1.msra.mxu0 %v119
    %146 = vmatprep.subr.mxu0 0.0
    %147 = vmatpush1.msra.mxu0 %v120
    %148 = vmatprep.subr.mxu0 0.0
    %149 = vmatpush1.msra.mxu0 %v121
    %150 = vmatprep.subr.mxu0 0.0
    %151 = vmatpush1.msra.mxu0 0.0
    %152 = vmatprep.subr.mxu0 0.0
    %153 = vmatpush1.msra.mxu0 0.0
    %154 = vmatprep.subr.mxu0 0.0
    %155 = vmatpush1.msra.mxu0 0.0
    %156 = vmatprep.subr.mxu0 0.0
    %157 = vmatpush1.msra.mxu0 0.0
    %158 = vmatprep.subr.mxu0 0.0
    %159 = vmatpush1.msra.mxu0 0.0
    %160 = vmatprep.subr.mxu0 0.0
    %161 = vmatpush1.msra.mxu0 0.0
    %162 = vmatprep.subr.mxu0 0.0
    %163 = vmatpush1.msra.mxu0 0.0
    %164 = vmatprep.subr.mxu0 0.0
    %165 = vmatpush1.msra.mxu0 0.0
    %166 = vmatprep.subr.mxu0 0.0
    %167 = vmatpush1.msra.mxu0 0.0
    %168 = vmatprep.subr.mxu0 0.0
    %169 = vmatpush1.msra.mxu0 0.0
    %170 = vmatprep.subr.mxu0 0.0
    %171 = vmatpush1.msra.mxu0 0.0
    %172 = vmatprep.subr.mxu0 0.0
    %173 = vmatpush1.msra.mxu0 0.0
    %174 = vmatprep.subr.mxu0 0.0
    %175 = vmatpush1.msra.mxu0 0.0
    %176 = vmatprep.subr.mxu0 0.0
    %177 = vmatpush1.msra.mxu0 0.0
    %178 = vmatprep.subr.mxu0 0.0
    %179 = vmatpush1.msra.mxu0 0.0
    %180 = vmatprep.subr.mxu0 0.0
    %181 = vmatpush1.msra.mxu0 0.0
    %182 = vmatprep.subr.mxu0 0.0
    %183 = vmatpush1.msra.mxu0 0.0
    %184 = vmatprep.subr.mxu0 0.0
    %185 = vmatpush1.msra.mxu0 0.0
    %186 = vmatprep.subr.mxu0 0.0
    %187 = vmatpush1.msra.mxu0 0.0
    %188 = vmatprep.subr.mxu0 0.0
    %189 = vmatpush1.msra.mxu0 0.0
    %190 = vmatprep.subr.mxu0 0.0
    %191 = vmatpush1.msra.mxu0 0.0
    %192 = vmatprep.subr.mxu0 0.0
    %193 = vmatpush1.msra.mxu0 0.0
    %194 = vmatprep.subr.mxu0 0.0
    %195 = vmatpush1.msra.mxu0 0.0
    %196 = vmatprep.subr.mxu0 0.0
    %197 = vmatpush1.msra.mxu0 0.0
    %198 = vmatprep.subr.mxu0 0.0
    %199 = vmatpush1.msra.mxu0 0.0
    %200 = vmatprep.subr.mxu0 0.0
    %201 = vmatpush1.msra.mxu0 0.0
    %202 = vmatprep.subr.mxu0 0.0
    %203 = vmatpush1.msra.mxu0 0.0
    %204 = vmatprep.subr.mxu0 0.0
    %205 = vmatpush1.msra.mxu0 0.0
    %206 = vmatprep.mubr.f32.mxu0 0.0
    %207 = vmatmul.mubr.f32.gmra.mrb[0].mxu0 %v131
    %v208 = vpop.f32.mrb[0].mxu0
    %v209 = vadd.f32 %v127, %v208
    %v210 = vpop.f32.mrb[0].mxu0
    %211 = vmatprep.mubr.f32.mxu0 0.0
    %212 = vmatmul.mubr.f32.gmra.mrb[0].mxu0 %v134
    %v213 = vpop.f32.mrb[0].mxu0
    %v214 = vadd.f32 %v127, %v213
    %v215 = vpop.f32.mrb[0].mxu0
    %216 = vmatprep.mubr.f32.mxu0 0.0
    %217 = vmatmul.mubr.f32.gmra.mrb[0].mxu0 %v137
    %v218 = vpop.f32.mrb[0].mxu0
    %v219 = vadd.f32 %v127, %v218
    %v220 = vpop.f32.mrb[0].mxu0
    %221 = vmatprep.mubr.f32.mxu0 0.0
    %222 = vmatmul.mubr.f32.gmra.mrb[0].mxu0 %v140
    %v223 = vpop.f32.mrb[0].mxu0
    %v224 = vadd.f32 %v127, %v223
    %v225 = vpop.f32.mrb[0].mxu0
    %226 = vdwg.mxu0
    %v227 = vmul.f32 %v209, 0.35355338
    %v228 = vmul.f32 %v214, 0.35355338
    %v229 = vmul.f32 %v219, 0.35355338
    %v230 = vmul.f32 %v224, 0.35355338
    %v231 = vld [vmem:[#allocation8] sm:$0xff]
    %v232 = vld [vmem:[#allocation8 + $0x8] sm:$0xff]
    %v233 = vld [vmem:[#allocation8 + $0x10] sm:$0xff]
    %v234 = vld [vmem:[#allocation8 + $0x18] sm:$0xff]
    %v235 = vld [vmem:[%s6] sm:$0x1]
    %v237 = vlaneseq
    %v238 = vshrl.u32 %v237, 7
    %v239 = vsub.s32 0, %v238
    %v240 = vrot.slane %v235, %v239
    %v243 = vsel %vm129, %v110, 0
    %v246 = vsel %vm129, %v111, 0
    %v249 = vsel %vm129, %v112, 0
    %v252 = vsel %vm129, %v113, 0
    %254 = vmatprep.subr.mxu0 0.0
    %255 = vmatpush1.msra.mxu0 %v231
    %256 = vmatprep.subr.mxu0 0.0
    %257 = vmatpush1.msra.mxu0 %v232
    %258 = vmatprep.subr.mxu0 0.0
    %259 = vmatpush1.msra.mxu0 %v233
    %260 = vmatprep.subr.mxu0 0.0
    %261 = vmatpush1.msra.mxu0 %v234
    %262 = vmatprep.subr.mxu0 0.0
    %263 = vmatpush1.msra.mxu0 0.0
    %264 = vmatprep.subr.mxu0 0.0
    %265 = vmatpush1.msra.mxu0 0.0
    %266 = vmatprep.subr.mxu0 0.0
    %267 = vmatpush1.msra.mxu0 0.0
    %268 = vmatprep.subr.mxu0 0.0
    %269 = vmatpush1.msra.mxu0 0.0
    %270 = vmatprep.subr.mxu0 0.0
    %271 = vmatpush1.msra.mxu0 0.0
    %272 = vmatprep.subr.mxu0 0.0
    %273 = vmatpush1.msra.mxu0 0.0
    %274 = vmatprep.subr.mxu0 0.0
    %275 = vmatpush1.msra.mxu0 0.0
    %276 = vmatprep.subr.mxu0 0.0
    %277 = vmatpush1.msra.mxu0 0.0
    %278 = vmatprep.subr.mxu0 0.0
    %279 = vmatpush1.msra.mxu0 0.0
    %280 = vmatprep.subr.mxu0 0.0
    %281 = vmatpush1.msra.mxu0 0.0
    %282 = vmatprep.subr.mxu0 0.0
    %283 = vmatpush1.msra.mxu0 0.0
    %284 = vmatprep.subr.mxu0 0.0
    %285 = vmatpush1.msra.mxu0 0.0
    %286 = vmatprep.subr.mxu0 0.0
    %287 = vmatpush1.msra.mxu0 0.0
    %288 = vmatprep.subr.mxu0 0.0
    %289 = vmatpush1.msra.mxu0 0.0
    %290 = vmatprep.subr.mxu0 0.0
    %291 = vmatpush1.msra.mxu0 0.0
    %292 = vmatprep.subr.mxu0 0.0
    %293 = vmatpush1.msra.mxu0 0.0
    %294 = vmatprep.subr.mxu0 0.0
    %295 = vmatpush1.msra.mxu0 0.0
    %296 = vmatprep.subr.mxu0 0.0
    %297 = vmatpush1.msra.mxu0 0.0
    %298 = vmatprep.subr.mxu0 0.0
    %299 = vmatpush1.msra.mxu0 0.0
    %300 = vmatprep.subr.mxu0 0.0
    %301 = vmatpush1.msra.mxu0 0.0
    %302 = vmatprep.subr.mxu0 0.0
    %303 = vmatpush1.msra.mxu0 0.0
    %304 = vmatprep.subr.mxu0 0.0
    %305 = vmatpush1.msra.mxu0 0.0
    %306 = vmatprep.subr.mxu0 0.0
    %307 = vmatpush1.msra.mxu0 0.0
    %308 = vmatprep.subr.mxu0 0.0
    %309 = vmatpush1.msra.mxu0 0.0
    %310 = vmatprep.subr.mxu0 0.0
    %311 = vmatpush1.msra.mxu0 0.0
    %312 = vmatprep.subr.mxu0 0.0
    %313 = vmatpush1.msra.mxu0 0.0
    %314 = vmatprep.subr.mxu0 0.0
    %315 = vmatpush1.msra.mxu0 0.0
    %316 = vmatprep.subr.mxu0 0.0
    %317 = vmatpush1.msra.mxu0 0.0
    %318 = vmatprep.mubr.f32.mxu0 0.0
    %319 = vmatmul.mubr.f32.gmra.mrb[0].mxu0 %v243
    %v320 = vpop.f32.mrb[0].mxu0
    %v321 = vadd.f32 %v240, %v320
    %v322 = vpop.f32.mrb[0].mxu0
    %323 = vmatprep.mubr.f32.mxu0 0.0
    %324 = vmatmul.mubr.f32.gmra.mrb[0].mxu0 %v246
    %v325 = vpop.f32.mrb[0].mxu0
    %v326 = vadd.f32 %v240, %v325
    %v327 = vpop.f32.mrb[0].mxu0
    %328 = vmatprep.mubr.f32.mxu0 0.0
    %329 = vmatmul.mubr.f32.gmra.mrb[0].mxu0 %v249
    %v330 = vpop.f32.mrb[0].mxu0
    %v331 = vadd.f32 %v240, %v330
    %v332 = vpop.f32.mrb[0].mxu0
    %333 = vmatprep.mubr.f32.mxu0 0.0
    %334 = vmatmul.mubr.f32.gmra.mrb[0].mxu0 %v252
    %v335 = vpop.f32.mrb[0].mxu0
    %v336 = vadd.f32 %v240, %v335
    %v337 = vpop.f32.mrb[0].mxu0
    %338 = vdwg.mxu0
    %v339 = vld [vmem:[#allocation10] sm:$0xff]
    %v340 = vld [vmem:[#allocation10 + $0x8] sm:$0xff]
    %v341 = vld [vmem:[#allocation10 + $0x10] sm:$0xff]
    %v342 = vld [vmem:[#allocation10 + $0x18] sm:$0xff]
    %v343 = vld [vmem:[%s8] sm:$0x1]
    %v345 = vlaneseq
    %v346 = vshrl.u32 %v345, 7
    %v347 = vsub.s32 0, %v346
    %v348 = vrot.slane %v343, %v347
    %v351 = vsel %vm129, %v114, 0
    %v354 = vsel %vm129, %v115, 0
    %v357 = vsel %vm129, %v116, 0
    %v360 = vsel %vm129, %v117, 0
    %362 = vmatprep.subr.mxu0 0.0
    %363 = vmatpush1.msra.mxu0 %v339
    %364 = vmatprep.subr.mxu0 0.0
    %365 = vmatpush1.msra.mxu0 %v340
    %366 = vmatprep.subr.mxu0 0.0
    %367 = vmatpush1.msra.mxu0 %v341
    %368 = vmatprep.subr.mxu0 0.0
    %369 = vmatpush1.msra.mxu0 %v342
    %370 = vmatprep.subr.mxu0 0.0
    %371 = vmatpush1.msra.mxu0 0.0
    %372 = vmatprep.subr.mxu0 0.0
    %373 = vmatpush1.msra.mxu0 0.0
    %374 = vmatprep.subr.mxu0 0.0
    %375 = vmatpush1.msra.mxu0 0.0
    %376 = vmatprep.subr.mxu0 0.0
    %377 = vmatpush1.msra.mxu0 0.0
    %378 = vmatprep.subr.mxu0 0.0
    %379 = vmatpush1.msra.mxu0 0.0
    %380 = vmatprep.subr.mxu0 0.0
    %381 = vmatpush1.msra.mxu0 0.0
    %382 = vmatprep.subr.mxu0 0.0
    %383 = vmatpush1.msra.mxu0 0.0
    %384 = vmatprep.subr.mxu0 0.0
    %385 = vmatpush1.msra.mxu0 0.0
    %386 = vmatprep.subr.mxu0 0.0
    %387 = vmatpush1.msra.mxu0 0.0
    %388 = vmatprep.subr.mxu0 0.0
    %389 = vmatpush1.msra.mxu0 0.0
    %390 = vmatprep.subr.mxu0 0.0
    %391 = vmatpush1.msra.mxu0 0.0
    %392 = vmatprep.subr.mxu0 0.0
    %393 = vmatpush1.msra.mxu0 0.0
    %394 = vmatprep.subr.mxu0 0.0
    %395 = vmatpush1.msra.mxu0 0.0
    %396 = vmatprep.subr.mxu0 0.0
    %397 = vmatpush1.msra.mxu0 0.0
    %398 = vmatprep.subr.mxu0 0.0
    %399 = vmatpush1.msra.mxu0 0.0
    %400 = vmatprep.subr.mxu0 0.0
    %401 = vmatpush1.msra.mxu0 0.0
    %402 = vmatprep.subr.mxu0 0.0
    %403 = vmatpush1.msra.mxu0 0.0
    %404 = vmatprep.subr.mxu0 0.0
    %405 = vmatpush1.msra.mxu0 0.0
    %406 = vmatprep.subr.mxu0 0.0
    %407 = vmatpush1.msra.mxu0 0.0
    %408 = vmatprep.subr.mxu0 0.0
    %409 = vmatpush1.msra.mxu0 0.0
    %410 = vmatprep.subr.mxu0 0.0
    %411 = vmatpush1.msra.mxu0 0.0
    %412 = vmatprep.subr.mxu0 0.0
    %413 = vmatpush1.msra.mxu0 0.0
    %414 = vmatprep.subr.mxu0 0.0
    %415 = vmatpush1.msra.mxu0 0.0
    %416 = vmatprep.subr.mxu0 0.0
    %417 = vmatpush1.msra.mxu0 0.0
    %418 = vmatprep.subr.mxu0 0.0
    %419 = vmatpush1.msra.mxu0 0.0
    %420 = vmatprep.subr.mxu0 0.0
    %421 = vmatpush1.msra.mxu0 0.0
    %422 = vmatprep.subr.mxu0 0.0
    %423 = vmatpush1.msra.mxu0 0.0
    %424 = vmatprep.subr.mxu0 0.0
    %425 = vmatpush1.msra.mxu0 0.0
    %426 = vmatprep.mubr.f32.mxu0 0.0
    %427 = vmatmul.mubr.f32.gmra.mrb[0].mxu0 %v351
    %v428 = vpop.f32.mrb[0].mxu0
    %v429 = vadd.f32 %v348, %v428
    %v430 = vpop.f32.mrb[0].mxu0
    %431 = vmatprep.mubr.f32.mxu0 0.0
    %432 = vmatmul.mubr.f32.gmra.mrb[0].mxu0 %v354
    %v433 = vpop.f32.mrb[0].mxu0
    %v434 = vadd.f32 %v348, %v433
    %v435 = vpop.f32.mrb[0].mxu0
    %436 = vmatprep.mubr.f32.mxu0 0.0
    %437 = vmatmul.mubr.f32.gmra.mrb[0].mxu0 %v357
    %v438 = vpop.f32.mrb[0].mxu0
    %v439 = vadd.f32 %v348, %v438
    %v440 = vpop.f32.mrb[0].mxu0
    %441 = vmatprep.mubr.f32.mxu0 0.0
    %442 = vmatmul.mubr.f32.gmra.mrb[0].mxu0 %v360
    %v443 = vpop.f32.mrb[0].mxu0
    %v444 = vadd.f32 %v348, %v443
    %v445 = vpop.f32.mrb[0].mxu0
    %446 = vdwg.mxu0
    %vm447 = vcmask 64512
    %v449 = vsel %vm447, %v227, 0
    %v452 = vsel %vm447, %v321, 0
    %454 = vmatprep.subr.mxu0 0.0
    %455 = vmatpush1.xpose.msra.mxu0 %v452
    %456 = vmatprep.subr.mxu0 0.0
    %457 = vmatpush1.xpose.msra.mxu0 0.0
    %458 = vmatprep.subr.mxu0 0.0
    %459 = vmatpush1.xpose.msra.mxu0 0.0
    %460 = vmatprep.subr.mxu0 0.0
    %461 = vmatpush1.xpose.msra.mxu0 0.0
    %462 = vmatprep.subr.mxu0 0.0
    %463 = vmatpush1.xpose.msra.mxu0 0.0
    %464 = vmatprep.subr.mxu0 0.0
    %465 = vmatpush1.xpose.msra.mxu0 0.0
    %466 = vmatprep.subr.mxu0 0.0
    %467 = vmatpush1.xpose.msra.mxu0 0.0
    %468 = vmatprep.subr.mxu0 0.0
    %469 = vmatpush1.xpose.msra.mxu0 0.0
    %470 = vmatprep.subr.mxu0 0.0
    %471 = vmatpush1.xpose.msra.mxu0 0.0
    %472 = vmatprep.subr.mxu0 0.0
    %473 = vmatpush1.xpose.msra.mxu0 0.0
    %474 = vmatprep.subr.mxu0 0.0
    %475 = vmatpush1.xpose.msra.mxu0 0.0
    %476 = vmatprep.subr.mxu0 0.0
    %477 = vmatpush1.xpose.msra.mxu0 0.0
    %478 = vmatprep.subr.mxu0 0.0
    %479 = vmatpush1.xpose.msra.mxu0 0.0
    %480 = vmatprep.subr.mxu0 0.0
    %481 = vmatpush1.xpose.msra.mxu0 0.0
    %482 = vmatprep.subr.mxu0 0.0
    %483 = vmatpush1.xpose.msra.mxu0 0.0
    %484 = vmatprep.subr.mxu0 0.0
    %485 = vmatpush1.xpose.msra.mxu0 0.0
    %486 = vmatprep.subr.mxu0 0.0
    %487 = vmatpush1.xpose.msra.mxu0 0.0
    %488 = vmatprep.subr.mxu0 0.0
    %489 = vmatpush1.xpose.msra.mxu0 0.0
    %490 = vmatprep.subr.mxu0 0.0
    %491 = vmatpush1.xpose.msra.mxu0 0.0
    %492 = vmatprep.subr.mxu0 0.0
    %493 = vmatpush1.xpose.msra.mxu0 0.0
    %494 = vmatprep.subr.mxu0 0.0
    %495 = vmatpush1.xpose.msra.mxu0 0.0
    %496 = vmatprep.subr.mxu0 0.0
    %497 = vmatpush1.xpose.msra.mxu0 0.0
    %498 = vmatprep.subr.mxu0 0.0
    %499 = vmatpush1.xpose.msra.mxu0 0.0
    %500 = vmatprep.subr.mxu0 0.0
    %501 = vmatpush1.xpose.msra.mxu0 0.0
    %502 = vmatprep.subr.mxu0 0.0
    %503 = vmatpush1.xpose.msra.mxu0 0.0
    %504 = vmatprep.subr.mxu0 0.0
    %505 = vmatpush1.xpose.msra.mxu0 0.0
    %506 = vmatprep.subr.mxu0 0.0
    %507 = vmatpush1.xpose.msra.mxu0 0.0
    %508 = vmatprep.subr.mxu0 0.0
    %509 = vmatpush1.xpose.msra.mxu0 0.0
    %510 = vmatprep.subr.mxu0 0.0
    %511 = vmatpush1.xpose.msra.mxu0 0.0
    %512 = vmatprep.subr.mxu0 0.0
    %513 = vmatpush1.xpose.msra.mxu0 0.0
    %514 = vmatprep.subr.mxu0 0.0
    %515 = vmatpush1.xpose.msra.mxu0 0.0
    %516 = vmatprep.subr.mxu0 0.0
    %517 = vmatpush1.xpose.msra.mxu0 0.0
    %518 = vmatprep.mubr.f32.mxu0 0.0
    %519 = vmatmul.mubr.f32.gmra.mrb[0].mxu0 %v449
    %v520 = vpop.f32.mrb[0].mxu0
    %v521 = vadd.f32 0.0, %v520
    %v522 = vpop.f32.mrb[0].mxu0
    %523 = vdwg.mxu0
    %v525 = vsel %vm447, %v228, 0
    %v528 = vsel %vm447, %v326, 0
    %530 = vmatprep.subr.mxu0 0.0
    %531 = vmatpush1.xpose.msra.mxu0 %v528
    %532 = vmatprep.subr.mxu0 0.0
    %533 = vmatpush1.xpose.msra.mxu0 0.0
    %534 = vmatprep.subr.mxu0 0.0
    %535 = vmatpush1.xpose.msra.mxu0 0.0
    %536 = vmatprep.subr.mxu0 0.0
    %537 = vmatpush1.xpose.msra.mxu0 0.0
    %538 = vmatprep.subr.mxu0 0.0
    %539 = vmatpush1.xpose.msra.mxu0 0.0
    %540 = vmatprep.subr.mxu0 0.0
    %541 = vmatpush1.xpose.msra.mxu0 0.0
    %542 = vmatprep.subr.mxu0 0.0
    %543 = vmatpush1.xpose.msra.mxu0 0.0
    %544 = vmatprep.subr.mxu0 0.0
    %545 = vmatpush1.xpose.msra.mxu0 0.0
    %546 = vmatprep.subr.mxu0 0.0
    %547 = vmatpush1.xpose.msra.mxu0 0.0
    %548 = vmatprep.subr.mxu0 0.0
    %549 = vmatpush1.xpose.msra.mxu0 0.0
    %550 = vmatprep.subr.mxu0 0.0
    %551 = vmatpush1.xpose.msra.mxu0 0.0
    %552 = vmatprep.subr.mxu0 0.0
    %553 = vmatpush1.xpose.msra.mxu0 0.0
    %554 = vmatprep.subr.mxu0 0.0
    %555 = vmatpush1.xpose.msra.mxu0 0.0
    %556 = vmatprep.subr.mxu0 0.0
    %557 = vmatpush1.xpose.msra.mxu0 0.0
    %558 = vmatprep.subr.mxu0 0.0
    %559 = vmatpush1.xpose.msra.mxu0 0.0
    %560 = vmatprep.subr.mxu0 0.0
    %561 = vmatpush1.xpose.msra.mxu0 0.0
    %562 = vmatprep.subr.mxu0 0.0
    %563 = vmatpush1.xpose.msra.mxu0 0.0
    %564 = vmatprep.subr.mxu0 0.0
    %565 = vmatpush1.xpose.msra.mxu0 0.0
    %566 = vmatprep.subr.mxu0 0.0
    %567 = vmatpush1.xpose.msra.mxu0 0.0
    %568 = vmatprep.subr.mxu0 0.0
    %569 = vmatpush1.xpose.msra.mxu0 0.0
    %570 = vmatprep.subr.mxu0 0.0
    %571 = vmatpush1.xpose.msra.mxu0 0.0
    %572 = vmatprep.subr.mxu0 0.0
    %573 = vmatpush1.xpose.msra.mxu0 0.0
    %574 = vmatprep.subr.mxu0 0.0
    %575 = vmatpush1.xpose.msra.mxu0 0.0
    %576 = vmatprep.subr.mxu0 0.0
    %577 = vmatpush1.xpose.msra.mxu0 0.0
    %578 = vmatprep.subr.mxu0 0.0
    %579 = vmatpush1.xpose.msra.mxu0 0.0
    %580 = vmatprep.subr.mxu0 0.0
    %581 = vmatpush1.xpose.msra.mxu0 0.0
    %582 = vmatprep.subr.mxu0 0.0
    %583 = vmatpush1.xpose.msra.mxu0 0.0
    %584 = vmatprep.subr.mxu0 0.0
    %585 = vmatpush1.xpose.msra.mxu0 0.0
    %586 = vmatprep.subr.mxu0 0.0
    %587 = vmatpush1.xpose.msra.mxu0 0.0
    %588 = vmatprep.subr.mxu0 0.0
    %589 = vmatpush1.xpose.msra.mxu0 0.0
    %590 = vmatprep.subr.mxu0 0.0
    %591 = vmatpush1.xpose.msra.mxu0 0.0
    %592 = vmatprep.subr.mxu0 0.0
    %593 = vmatpush1.xpose.msra.mxu0 0.0
    %594 = vmatprep.mubr.f32.mxu0 0.0
    %595 = vmatmul.mubr.f32.gmra.mrb[0].mxu0 %v525
    %v596 = vpop.f32.mrb[0].mxu0
    %v597 = vadd.f32 0.0, %v596
    %v598 = vpop.f32.mrb[0].mxu0
    %599 = vdwg.mxu0
    %v601 = vsel %vm447, %v229, 0
    %v604 = vsel %vm447, %v331, 0
    %606 = vmatprep.subr.mxu0 0.0
    %607 = vmatpush1.xpose.msra.mxu0 %v604
    %608 = vmatprep.subr.mxu0 0.0
    %609 = vmatpush1.xpose.msra.mxu0 0.0
    %610 = vmatprep.subr.mxu0 0.0
    %611 = vmatpush1.xpose.msra.mxu0 0.0
    %612 = vmatprep.subr.mxu0 0.0
    %613 = vmatpush1.xpose.msra.mxu0 0.0
    %614 = vmatprep.subr.mxu0 0.0
    %615 = vmatpush1.xpose.msra.mxu0 0.0
    %616 = vmatprep.subr.mxu0 0.0
    %617 = vmatpush1.xpose.msra.mxu0 0.0
    %618 = vmatprep.subr.mxu0 0.0
    %619 = vmatpush1.xpose.msra.mxu0 0.0
    %620 = vmatprep.subr.mxu0 0.0
    %621 = vmatpush1.xpose.msra.mxu0 0.0
    %622 = vmatprep.subr.mxu0 0.0
    %623 = vmatpush1.xpose.msra.mxu0 0.0
    %624 = vmatprep.subr.mxu0 0.0
    %625 = vmatpush1.xpose.msra.mxu0 0.0
    %626 = vmatprep.subr.mxu0 0.0
    %627 = vmatpush1.xpose.msra.mxu0 0.0
    %628 = vmatprep.subr.mxu0 0.0
    %629 = vmatpush1.xpose.msra.mxu0 0.0
    %630 = vmatprep.subr.mxu0 0.0
    %631 = vmatpush1.xpose.msra.mxu0 0.0
    %632 = vmatprep.subr.mxu0 0.0
    %633 = vmatpush1.xpose.msra.mxu0 0.0
    %634 = vmatprep.subr.mxu0 0.0
    %635 = vmatpush1.xpose.msra.mxu0 0.0
    %636 = vmatprep.subr.mxu0 0.0
    %637 = vmatpush1.xpose.msra.mxu0 0.0
    %638 = vmatprep.subr.mxu0 0.0
    %639 = vmatpush1.xpose.msra.mxu0 0.0
    %640 = vmatprep.subr.mxu0 0.0
    %641 = vmatpush1.xpose.msra.mxu0 0.0
    %642 = vmatprep.subr.mxu0 0.0
    %643 = vmatpush1.xpose.msra.mxu0 0.0
    %644 = vmatprep.subr.mxu0 0.0
    %645 = vmatpush1.xpose.msra.mxu0 0.0
    %646 = vmatprep.subr.mxu0 0.0
    %647 = vmatpush1.xpose.msra.mxu0 0.0
    %648 = vmatprep.subr.mxu0 0.0
    %649 = vmatpush1.xpose.msra.mxu0 0.0
    %650 = vmatprep.subr.mxu0 0.0
    %651 = vmatpush1.xpose.msra.mxu0 0.0
    %652 = vmatprep.subr.mxu0 0.0
    %653 = vmatpush1.xpose.msra.mxu0 0.0
    %654 = vmatprep.subr.mxu0 0.0
    %655 = vmatpush1.xpose.msra.mxu0 0.0
    %656 = vmatprep.subr.mxu0 0.0
    %657 = vmatpush1.xpose.msra.mxu0 0.0
    %658 = vmatprep.subr.mxu0 0.0
    %659 = vmatpush1.xpose.msra.mxu0 0.0
    %660 = vmatprep.subr.mxu0 0.0
    %661 = vmatpush1.xpose.msra.mxu0 0.0
    %662 = vmatprep.subr.mxu0 0.0
    %663 = vmatpush1.xpose.msra.mxu0 0.0
    %664 = vmatprep.subr.mxu0 0.0
    %665 = vmatpush1.xpose.msra.mxu0 0.0
    %666 = vmatprep.subr.mxu0 0.0
    %667 = vmatpush1.xpose.msra.mxu0 0.0
    %668 = vmatprep.subr.mxu0 0.0
    %669 = vmatpush1.xpose.msra.mxu0 0.0
    %670 = vmatprep.mubr.f32.mxu0 0.0
    %671 = vmatmul.mubr.f32.gmra.mrb[0].mxu0 %v601
    %v672 = vpop.f32.mrb[0].mxu0
    %v673 = vadd.f32 0.0, %v672
    %v674 = vpop.f32.mrb[0].mxu0
    %675 = vdwg.mxu0
    %v677 = vsel %vm447, %v230, 0
    %v680 = vsel %vm447, %v336, 0
    %682 = vmatprep.subr.mxu0 0.0
    %683 = vmatpush1.xpose.msra.mxu0 %v680
    %684 = vmatprep.subr.mxu0 0.0
    %685 = vmatpush1.xpose.msra.mxu0 0.0
    %686 = vmatprep.subr.mxu0 0.0
    %687 = vmatpush1.xpose.msra.mxu0 0.0
    %688 = vmatprep.subr.mxu0 0.0
    %689 = vmatpush1.xpose.msra.mxu0 0.0
    %690 = vmatprep.subr.mxu0 0.0
    %691 = vmatpush1.xpose.msra.mxu0 0.0
    %692 = vmatprep.subr.mxu0 0.0
    %693 = vmatpush1.xpose.msra.mxu0 0.0
    %694 = vmatprep.subr.mxu0 0.0
    %695 = vmatpush1.xpose.msra.mxu0 0.0
    %696 = vmatprep.subr.mxu0 0.0
    %697 = vmatpush1.xpose.msra.mxu0 0.0
    %698 = vmatprep.subr.mxu0 0.0
    %699 = vmatpush1.xpose.msra.mxu0 0.0
    %700 = vmatprep.subr.mxu0 0.0
    %701 = vmatpush1.xpose.msra.mxu0 0.0
    %702 = vmatprep.subr.mxu0 0.0
    %703 = vmatpush1.xpose.msra.mxu0 0.0
    %704 = vmatprep.subr.mxu0 0.0
    %705 = vmatpush1.xpose.msra.mxu0 0.0
    %706 = vmatprep.subr.mxu0 0.0
    %707 = vmatpush1.xpose.msra.mxu0 0.0
    %708 = vmatprep.subr.mxu0 0.0
    %709 = vmatpush1.xpose.msra.mxu0 0.0
    %710 = vmatprep.subr.mxu0 0.0
    %711 = vmatpush1.xpose.msra.mxu0 0.0
    %712 = vmatprep.subr.mxu0 0.0
    %713 = vmatpush1.xpose.msra.mxu0 0.0
    %714 = vmatprep.subr.mxu0 0.0
    %715 = vmatpush1.xpose.msra.mxu0 0.0
    %716 = vmatprep.subr.mxu0 0.0
    %717 = vmatpush1.xpose.msra.mxu0 0.0
    %718 = vmatprep.subr.mxu0 0.0
    %719 = vmatpush1.xpose.msra.mxu0 0.0
    %720 = vmatprep.subr.mxu0 0.0
    %721 = vmatpush1.xpose.msra.mxu0 0.0
    %722 = vmatprep.subr.mxu0 0.0
    %723 = vmatpush1.xpose.msra.mxu0 0.0
    %724 = vmatprep.subr.mxu0 0.0
    %725 = vmatpush1.xpose.msra.mxu0 0.0
    %726 = vmatprep.subr.mxu0 0.0
    %727 = vmatpush1.xpose.msra.mxu0 0.0
    %728 = vmatprep.subr.mxu0 0.0
    %729 = vmatpush1.xpose.msra.mxu0 0.0
    %730 = vmatprep.subr.mxu0 0.0
    %731 = vmatpush1.xpose.msra.mxu0 0.0
    %732 = vmatprep.subr.mxu0 0.0
    %733 = vmatpush1.xpose.msra.mxu0 0.0
    %734 = vmatprep.subr.mxu0 0.0
    %735 = vmatpush1.xpose.msra.mxu0 0.0
    %736 = vmatprep.subr.mxu0 0.0
    %737 = vmatpush1.xpose.msra.mxu0 0.0
    %738 = vmatprep.subr.mxu0 0.0
    %739 = vmatpush1.xpose.msra.mxu0 0.0
    %740 = vmatprep.subr.mxu0 0.0
    %741 = vmatpush1.xpose.msra.mxu0 0.0
    %742 = vmatprep.subr.mxu0 0.0
    %743 = vmatpush1.xpose.msra.mxu0 0.0
    %744 = vmatprep.subr.mxu0 0.0
    %745 = vmatpush1.xpose.msra.mxu0 0.0
    %746 = vmatprep.mubr.f32.mxu0 0.0
    %747 = vmatmul.mubr.f32.gmra.mrb[0].mxu0 %v677
    %v748 = vpop.f32.mrb[0].mxu0
    %v749 = vadd.f32 0.0, %v748
    %v750 = vpop.f32.mrb[0].mxu0
    %751 = vdwg.mxu0
    %752 = vrot.lane.b32.xlu0 %v227, 120
    %v753 = vpop.permute.xlu0 %752
    %754 = vrot.lane.b32.xlu0 %v321, 120
    %v755 = vpop.permute.xlu0 %754
    %v756 = vsel %vm447, %v753, 0
    %v758 = vsel %vm447, %v755, 0
    %760 = vmatprep.subr.mxu0 0.0
    %761 = vmatpush1.xpose.msra.mxu0 %v758
    %762 = vmatprep.subr.mxu0 0.0
    %763 = vmatpush1.xpose.msra.mxu0 0.0
    %764 = vmatprep.subr.mxu0 0.0
    %765 = vmatpush1.xpose.msra.mxu0 0.0
    %766 = vmatprep.subr.mxu0 0.0
    %767 = vmatpush1.xpose.msra.mxu0 0.0
    %768 = vmatprep.subr.mxu0 0.0
    %769 = vmatpush1.xpose.msra.mxu0 0.0
    %770 = vmatprep.subr.mxu0 0.0
    %771 = vmatpush1.xpose.msra.mxu0 0.0
    %772 = vmatprep.subr.mxu0 0.0
    %773 = vmatpush1.xpose.msra.mxu0 0.0
    %774 = vmatprep.subr.mxu0 0.0
    %775 = vmatpush1.xpose.msra.mxu0 0.0
    %776 = vmatprep.subr.mxu0 0.0
    %777 = vmatpush1.xpose.msra.mxu0 0.0
    %778 = vmatprep.subr.mxu0 0.0
    %779 = vmatpush1.xpose.msra.mxu0 0.0
    %780 = vmatprep.subr.mxu0 0.0
    %781 = vmatpush1.xpose.msra.mxu0 0.0
    %782 = vmatprep.subr.mxu0 0.0
    %783 = vmatpush1.xpose.msra.mxu0 0.0
    %784 = vmatprep.subr.mxu0 0.0
    %785 = vmatpush1.xpose.msra.mxu0 0.0
    %786 = vmatprep.subr.mxu0 0.0
    %787 = vmatpush1.xpose.msra.mxu0 0.0
    %788 = vmatprep.subr.mxu0 0.0
    %789 = vmatpush1.xpose.msra.mxu0 0.0
    %790 = vmatprep.subr.mxu0 0.0
    %791 = vmatpush1.xpose.msra.mxu0 0.0
    %792 = vmatprep.subr.mxu0 0.0
    %793 = vmatpush1.xpose.msra.mxu0 0.0
    %794 = vmatprep.subr.mxu0 0.0
    %795 = vmatpush1.xpose.msra.mxu0 0.0
    %796 = vmatprep.subr.mxu0 0.0
    %797 = vmatpush1.xpose.msra.mxu0 0.0
    %798 = vmatprep.subr.mxu0 0.0
    %799 = vmatpush1.xpose.msra.mxu0 0.0
    %800 = vmatprep.subr.mxu0 0.0
    %801 = vmatpush1.xpose.msra.mxu0 0.0
    %802 = vmatprep.subr.mxu0 0.0
    %803 = vmatpush1.xpose.msra.mxu0 0.0
    %804 = vmatprep.subr.mxu0 0.0
    %805 = vmatpush1.xpose.msra.mxu0 0.0
    %806 = vmatprep.subr.mxu0 0.0
    %807 = vmatpush1.xpose.msra.mxu0 0.0
    %808 = vmatprep.subr.mxu0 0.0
    %809 = vmatpush1.xpose.msra.mxu0 0.0
    %810 = vmatprep.subr.mxu0 0.0
    %811 = vmatpush1.xpose.msra.mxu0 0.0
    %812 = vmatprep.subr.mxu0 0.0
    %813 = vmatpush1.xpose.msra.mxu0 0.0
    %814 = vmatprep.subr.mxu0 0.0
    %815 = vmatpush1.xpose.msra.mxu0 0.0
    %816 = vmatprep.subr.mxu0 0.0
    %817 = vmatpush1.xpose.msra.mxu0 0.0
    %818 = vmatprep.subr.mxu0 0.0
    %819 = vmatpush1.xpose.msra.mxu0 0.0
    %820 = vmatprep.subr.mxu0 0.0
    %821 = vmatpush1.xpose.msra.mxu0 0.0
    %822 = vmatprep.subr.mxu0 0.0
    %823 = vmatpush1.xpose.msra.mxu0 0.0
    %824 = vmatprep.mubr.f32.mxu0 0.0
    %825 = vmatmul.mubr.f32.gmra.mrb[0].mxu0 %v756
    %v826 = vpop.f32.mrb[0].mxu0
    %v827 = vadd.f32 0.0, %v826
    %v828 = vpop.f32.mrb[0].mxu0
    %829 = vdwg.mxu0
    %830 = vrot.lane.b32.xlu0 %v228, 120
    %v831 = vpop.permute.xlu0 %830
    %832 = vrot.lane.b32.xlu0 %v326, 120
    %v833 = vpop.permute.xlu0 %832
    %v834 = vsel %vm447, %v831, 0
    %v836 = vsel %vm447, %v833, 0
    %838 = vmatprep.subr.mxu0 0.0
    %839 = vmatpush1.xpose.msra.mxu0 %v836
    %840 = vmatprep.subr.mxu0 0.0
    %841 = vmatpush1.xpose.msra.mxu0 0.0
    %842 = vmatprep.subr.mxu0 0.0
    %843 = vmatpush1.xpose.msra.mxu0 0.0
    %844 = vmatprep.subr.mxu0 0.0
    %845 = vmatpush1.xpose.msra.mxu0 0.0
    %846 = vmatprep.subr.mxu0 0.0
    %847 = vmatpush1.xpose.msra.mxu0 0.0
    %848 = vmatprep.subr.mxu0 0.0
    %849 = vmatpush1.xpose.msra.mxu0 0.0
    %850 = vmatprep.subr.mxu0 0.0
    %851 = vmatpush1.xpose.msra.mxu0 0.0
    %852 = vmatprep.subr.mxu0 0.0
    %853 = vmatpush1.xpose.msra.mxu0 0.0
    %854 = vmatprep.subr.mxu0 0.0
    %855 = vmatpush1.xpose.msra.mxu0 0.0
    %856 = vmatprep.subr.mxu0 0.0
    %857 = vmatpush1.xpose.msra.mxu0 0.0
    %858 = vmatprep.subr.mxu0 0.0
    %859 = vmatpush1.xpose.msra.mxu0 0.0
    %860 = vmatprep.subr.mxu0 0.0
    %861 = vmatpush1.xpose.msra.mxu0 0.0
    %862 = vmatprep.subr.mxu0 0.0
    %863 = vmatpush1.xpose.msra.mxu0 0.0
    %864 = vmatprep.subr.mxu0 0.0
    %865 = vmatpush1.xpose.msra.mxu0 0.0
    %866 = vmatprep.subr.mxu0 0.0
    %867 = vmatpush1.xpose.msra.mxu0 0.0
    %868 = vmatprep.subr.mxu0 0.0
    %869 = vmatpush1.xpose.msra.mxu0 0.0
    %870 = vmatprep.subr.mxu0 0.0
    %871 = vmatpush1.xpose.msra.mxu0 0.0
    %872 = vmatprep.subr.mxu0 0.0
    %873 = vmatpush1.xpose.msra.mxu0 0.0
    %874 = vmatprep.subr.mxu0 0.0
    %875 = vmatpush1.xpose.msra.mxu0 0.0
    %876 = vmatprep.subr.mxu0 0.0
    %877 = vmatpush1.xpose.msra.mxu0 0.0
    %878 = vmatprep.subr.mxu0 0.0
    %879 = vmatpush1.xpose.msra.mxu0 0.0
    %880 = vmatprep.subr.mxu0 0.0
    %881 = vmatpush1.xpose.msra.mxu0 0.0
    %882 = vmatprep.subr.mxu0 0.0
    %883 = vmatpush1.xpose.msra.mxu0 0.0
    %884 = vmatprep.subr.mxu0 0.0
    %885 = vmatpush1.xpose.msra.mxu0 0.0
    %886 = vmatprep.subr.mxu0 0.0
    %887 = vmatpush1.xpose.msra.mxu0 0.0
    %888 = vmatprep.subr.mxu0 0.0
    %889 = vmatpush1.xpose.msra.mxu0 0.0
    %890 = vmatprep.subr.mxu0 0.0
    %891 = vmatpush1.xpose.msra.mxu0 0.0
    %892 = vmatprep.subr.mxu0 0.0
    %893 = vmatpush1.xpose.msra.mxu0 0.0
    %894 = vmatprep.subr.mxu0 0.0
    %895 = vmatpush1.xpose.msra.mxu0 0.0
    %896 = vmatprep.subr.mxu0 0.0
    %897 = vmatpush1.xpose.msra.mxu0 0.0
    %898 = vmatprep.subr.mxu0 0.0
    %899 = vmatpush1.xpose.msra.mxu0 0.0
    %900 = vmatprep.subr.mxu0 0.0
    %901 = vmatpush1.xpose.msra.mxu0 0.0
    %902 = vmatprep.mubr.f32.mxu0 0.0
    %903 = vmatmul.mubr.f32.gmra.mrb[0].mxu0 %v834
    %v904 = vpop.f32.mrb[0].mxu0
    %v905 = vadd.f32 0.0, %v904
    %v906 = vpop.f32.mrb[0].mxu0
    %907 = vdwg.mxu0
    %908 = vrot.lane.b32.xlu0 %v229, 120
    %v909 = vpop.permute.xlu0 %908
    %910 = vrot.lane.b32.xlu0 %v331, 120
    %v911 = vpop.permute.xlu0 %910
    %v912 = vsel %vm447, %v909, 0
    %v914 = vsel %vm447, %v911, 0
    %916 = vmatprep.subr.mxu0 0.0
    %917 = vmatpush1.xpose.msra.mxu0 %v914
    %918 = vmatprep.subr.mxu0 0.0
    %919 = vmatpush1.xpose.msra.mxu0 0.0
    %920 = vmatprep.subr.mxu0 0.0
    %921 = vmatpush1.xpose.msra.mxu0 0.0
    %922 = vmatprep.subr.mxu0 0.0
    %923 = vmatpush1.xpose.msra.mxu0 0.0
    %924 = vmatprep.subr.mxu0 0.0
    %925 = vmatpush1.xpose.msra.mxu0 0.0
    %926 = vmatprep.subr.mxu0 0.0
    %927 = vmatpush1.xpose.msra.mxu0 0.0
    %928 = vmatprep.subr.mxu0 0.0
    %929 = vmatpush1.xpose.msra.mxu0 0.0
    %930 = vmatprep.subr.mxu0 0.0
    %931 = vmatpush1.xpose.msra.mxu0 0.0
    %932 = vmatprep.subr.mxu0 0.0
    %933 = vmatpush1.xpose.msra.mxu0 0.0
    %934 = vmatprep.subr.mxu0 0.0
    %935 = vmatpush1.xpose.msra.mxu0 0.0
    %936 = vmatprep.subr.mxu0 0.0
    %937 = vmatpush1.xpose.msra.mxu0 0.0
    %938 = vmatprep.subr.mxu0 0.0
    %939 = vmatpush1.xpose.msra.mxu0 0.0
    %940 = vmatprep.subr.mxu0 0.0
    %941 = vmatpush1.xpose.msra.mxu0 0.0
    %942 = vmatprep.subr.mxu0 0.0
    %943 = vmatpush1.xpose.msra.mxu0 0.0
    %944 = vmatprep.subr.mxu0 0.0
    %945 = vmatpush1.xpose.msra.mxu0 0.0
    %946 = vmatprep.subr.mxu0 0.0
    %947 = vmatpush1.xpose.msra.mxu0 0.0
    %948 = vmatprep.subr.mxu0 0.0
    %949 = vmatpush1.xpose.msra.mxu0 0.0
    %950 = vmatprep.subr.mxu0 0.0
    %951 = vmatpush1.xpose.msra.mxu0 0.0
    %952 = vmatprep.subr.mxu0 0.0
    %953 = vmatpush1.xpose.msra.mxu0 0.0
    %954 = vmatprep.subr.mxu0 0.0
    %955 = vmatpush1.xpose.msra.mxu0 0.0
    %956 = vmatprep.subr.mxu0 0.0
    %957 = vmatpush1.xpose.msra.mxu0 0.0
    %958 = vmatprep.subr.mxu0 0.0
    %959 = vmatpush1.xpose.msra.mxu0 0.0
    %960 = vmatprep.subr.mxu0 0.0
    %961 = vmatpush1.xpose.msra.mxu0 0.0
    %962 = vmatprep.subr.mxu0 0.0
    %963 = vmatpush1.xpose.msra.mxu0 0.0
    %964 = vmatprep.subr.mxu0 0.0
    %965 = vmatpush1.xpose.msra.mxu0 0.0
    %966 = vmatprep.subr.mxu0 0.0
    %967 = vmatpush1.xpose.msra.mxu0 0.0
    %968 = vmatprep.subr.mxu0 0.0
    %969 = vmatpush1.xpose.msra.mxu0 0.0
    %970 = vmatprep.subr.mxu0 0.0
    %971 = vmatpush1.xpose.msra.mxu0 0.0
    %972 = vmatprep.subr.mxu0 0.0
    %973 = vmatpush1.xpose.msra.mxu0 0.0
    %974 = vmatprep.subr.mxu0 0.0
    %975 = vmatpush1.xpose.msra.mxu0 0.0
    %976 = vmatprep.subr.mxu0 0.0
    %977 = vmatpush1.xpose.msra.mxu0 0.0
    %978 = vmatprep.subr.mxu0 0.0
    %979 = vmatpush1.xpose.msra.mxu0 0.0
    %980 = vmatprep.mubr.f32.mxu0 0.0
    %981 = vmatmul.mubr.f32.gmra.mrb[0].mxu0 %v912
    %v982 = vpop.f32.mrb[0].mxu0
    %v983 = vadd.f32 0.0, %v982
    %v984 = vpop.f32.mrb[0].mxu0
    %985 = vdwg.mxu0
    %986 = vrot.lane.b32.xlu0 %v230, 120
    %v987 = vpop.permute.xlu0 %986
    %988 = vrot.lane.b32.xlu0 %v336, 120
    %v989 = vpop.permute.xlu0 %988
    %v990 = vsel %vm447, %v987, 0
    %v992 = vsel %vm447, %v989, 0
    %994 = vmatprep.subr.mxu0 0.0
    %995 = vmatpush1.xpose.msra.mxu0 %v992
    %996 = vmatprep.subr.mxu0 0.0
    %997 = vmatpush1.xpose.msra.mxu0 0.0
    %998 = vmatprep.subr.mxu0 0.0
    %999 = vmatpush1.xpose.msra.mxu0 0.0
    %1000 = vmatprep.subr.mxu0 0.0
    %1001 = vmatpush1.xpose.msra.mxu0 0.0
    %1002 = vmatprep.subr.mxu0 0.0
    %1003 = vmatpush1.xpose.msra.mxu0 0.0
    %1004 = vmatprep.subr.mxu0 0.0
    %1005 = vmatpush1.xpose.msra.mxu0 0.0
    %1006 = vmatprep.subr.mxu0 0.0
    %1007 = vmatpush1.xpose.msra.mxu0 0.0
    %1008 = vmatprep.subr.mxu0 0.0
    %1009 = vmatpush1.xpose.msra.mxu0 0.0
    %1010 = vmatprep.subr.mxu0 0.0
    %1011 = vmatpush1.xpose.msra.mxu0 0.0
    %1012 = vmatprep.subr.mxu0 0.0
    %1013 = vmatpush1.xpose.msra.mxu0 0.0
    %1014 = vmatprep.subr.mxu0 0.0
    %1015 = vmatpush1.xpose.msra.mxu0 0.0
    %1016 = vmatprep.subr.mxu0 0.0
    %1017 = vmatpush1.xpose.msra.mxu0 0.0
    %1018 = vmatprep.subr.mxu0 0.0
    %1019 = vmatpush1.xpose.msra.mxu0 0.0
    %1020 = vmatprep.subr.mxu0 0.0
    %1021 = vmatpush1.xpose.msra.mxu0 0.0
    %1022 = vmatprep.subr.mxu0 0.0
    %1023 = vmatpush1.xpose.msra.mxu0 0.0
    %1024 = vmatprep.subr.mxu0 0.0
    %1025 = vmatpush1.xpose.msra.mxu0 0.0
    %1026 = vmatprep.subr.mxu0 0.0
    %1027 = vmatpush1.xpose.msra.mxu0 0.0
    %1028 = vmatprep.subr.mxu0 0.0
    %1029 = vmatpush1.xpose.msra.mxu0 0.0
    %1030 = vmatprep.subr.mxu0 0.0
    %1031 = vmatpush1.xpose.msra.mxu0 0.0
    %1032 = vmatprep.subr.mxu0 0.0
    %1033 = vmatpush1.xpose.msra.mxu0 0.0
    %1034 = vmatprep.subr.mxu0 0.0
    %1035 = vmatpush1.xpose.msra.mxu0 0.0
    %1036 = vmatprep.subr.mxu0 0.0
    %1037 = vmatpush1.xpose.msra.mxu0 0.0
    %1038 = vmatprep.subr.mxu0 0.0
    %1039 = vmatpush1.xpose.msra.mxu0 0.0
    %1040 = vmatprep.subr.mxu0 0.0
    %1041 = vmatpush1.xpose.msra.mxu0 0.0
    %1042 = vmatprep.subr.mxu0 0.0
    %1043 = vmatpush1.xpose.msra.mxu0 0.0
    %1044 = vmatprep.subr.mxu0 0.0
    %1045 = vmatpush1.xpose.msra.mxu0 0.0
    %1046 = vmatprep.subr.mxu0 0.0
    %1047 = vmatpush1.xpose.msra.mxu0 0.0
    %1048 = vmatprep.subr.mxu0 0.0
    %1049 = vmatpush1.xpose.msra.mxu0 0.0
    %1050 = vmatprep.subr.mxu0 0.0
    %1051 = vmatpush1.xpose.msra.mxu0 0.0
    %1052 = vmatprep.subr.mxu0 0.0
    %1053 = vmatpush1.xpose.msra.mxu0 0.0
    %1054 = vmatprep.subr.mxu0 0.0
    %1055 = vmatpush1.xpose.msra.mxu0 0.0
    %1056 = vmatprep.subr.mxu0 0.0
    %1057 = vmatpush1.xpose.msra.mxu0 0.0
    %1058 = vmatprep.mubr.f32.mxu0 0.0
    %1059 = vmatmul.mubr.f32.gmra.mrb[0].mxu0 %v990
    %v1060 = vpop.f32.mrb[0].mxu0
    %v1061 = vadd.f32 0.0, %v1060
    %v1062 = vpop.f32.mrb[0].mxu0
    %1063 = vdwg.mxu0
    %1064 = vrot.lane.b32.xlu0 %v227, 112
    %v1065 = vpop.permute.xlu0 %1064
    %1066 = vrot.lane.b32.xlu0 %v321, 112
    %v1067 = vpop.permute.xlu0 %1066
    %v1068 = vsel %vm447, %v1065, 0
    %v1070 = vsel %vm447, %v1067, 0
    %1072 = vmatprep.subr.mxu0 0.0
    %1073 = vmatpush1.xpose.msra.mxu0 %v1070
    %1074 = vmatprep.subr.mxu0 0.0
    %1075 = vmatpush1.xpose.msra.mxu0 0.0
    %1076 = vmatprep.subr.mxu0 0.0
    %1077 = vmatpush1.xpose.msra.mxu0 0.0
    %1078 = vmatprep.subr.mxu0 0.0
    %1079 = vmatpush1.xpose.msra.mxu0 0.0
    %1080 = vmatprep.subr.mxu0 0.0
    %1081 = vmatpush1.xpose.msra.mxu0 0.0
    %1082 = vmatprep.subr.mxu0 0.0
    %1083 = vmatpush1.xpose.msra.mxu0 0.0
    %1084 = vmatprep.subr.mxu0 0.0
    %1085 = vmatpush1.xpose.msra.mxu0 0.0
    %1086 = vmatprep.subr.mxu0 0.0
    %1087 = vmatpush1.xpose.msra.mxu0 0.0
    %1088 = vmatprep.subr.mxu0 0.0
    %1089 = vmatpush1.xpose.msra.mxu0 0.0
    %1090 = vmatprep.subr.mxu0 0.0
    %1091 = vmatpush1.xpose.msra.mxu0 0.0
    %1092 = vmatprep.subr.mxu0 0.0
    %1093 = vmatpush1.xpose.msra.mxu0 0.0
    %1094 = vmatprep.subr.mxu0 0.0
    %1095 = vmatpush1.xpose.msra.mxu0 0.0
    %1096 = vmatprep.subr.mxu0 0.0
    %1097 = vmatpush1.xpose.msra.mxu0 0.0
    %1098 = vmatprep.subr.mxu0 0.0
    %1099 = vmatpush1.xpose.msra.mxu0 0.0
    %1100 = vmatprep.subr.mxu0 0.0
    %1101 = vmatpush1.xpose.msra.mxu0 0.0
    %1102 = vmatprep.subr.mxu0 0.0
    %1103 = vmatpush1.xpose.msra.mxu0 0.0
    %1104 = vmatprep.subr.mxu0 0.0
    %1105 = vmatpush1.xpose.msra.mxu0 0.0
    %1106 = vmatprep.subr.mxu0 0.0
    %1107 = vmatpush1.xpose.msra.mxu0 0.0
    %1108 = vmatprep.subr.mxu0 0.0
    %1109 = vmatpush1.xpose.msra.mxu0 0.0
    %1110 = vmatprep.subr.mxu0 0.0
    %1111 = vmatpush1.xpose.msra.mxu0 0.0
    %1112 = vmatprep.subr.mxu0 0.0
    %1113 = vmatpush1.xpose.msra.mxu0 0.0
    %1114 = vmatprep.subr.mxu0 0.0
    %1115 = vmatpush1.xpose.msra.mxu0 0.0
    %1116 = vmatprep.subr.mxu0 0.0
    %1117 = vmatpush1.xpose.msra.mxu0 0.0
    %1118 = vmatprep.subr.mxu0 0.0
    %1119 = vmatpush1.xpose.msra.mxu0 0.0
    %1120 = vmatprep.subr.mxu0 0.0
    %1121 = vmatpush1.xpose.msra.mxu0 0.0
    %1122 = vmatprep.subr.mxu0 0.0
    %1123 = vmatpush1.xpose.msra.mxu0 0.0
    %1124 = vmatprep.subr.mxu0 0.0
    %1125 = vmatpush1.xpose.msra.mxu0 0.0
    %1126 = vmatprep.subr.mxu0 0.0
    %1127 = vmatpush1.xpose.msra.mxu0 0.0
    %1128 = vmatprep.subr.mxu0 0.0
    %1129 = vmatpush1.xpose.msra.mxu0 0.0
    %1130 = vmatprep.subr.mxu0 0.0
    %1131 = vmatpush1.xpose.msra.mxu0 0.0
    %1132 = vmatprep.subr.mxu0 0.0
    %1133 = vmatpush1.xpose.msra.mxu0 0.0
    %1134 = vmatprep.subr.mxu0 0.0
    %1135 = vmatpush1.xpose.msra.mxu0 0.0
    %1136 = vmatprep.mubr.f32.mxu0 0.0
    %1137 = vmatmul.mubr.f32.gmra.mrb[0].mxu0 %v1068
    %v1138 = vpop.f32.mrb[0].mxu0
    %v1139 = vadd.f32 0.0, %v1138
    %v1140 = vpop.f32.mrb[0].mxu0
    %1141 = vdwg.mxu0
    %1142 = vrot.lane.b32.xlu0 %v228, 112
    %v1143 = vpop.permute.xlu0 %1142
    %1144 = vrot.lane.b32.xlu0 %v326, 112
    %v1145 = vpop.permute.xlu0 %1144
    %v1146 = vsel %vm447, %v1143, 0
    %v1148 = vsel %vm447, %v1145, 0
    %1150 = vmatprep.subr.mxu0 0.0
    %1151 = vmatpush1.xpose.msra.mxu0 %v1148
    %1152 = vmatprep.subr.mxu0 0.0
    %1153 = vmatpush1.xpose.msra.mxu0 0.0
    %1154 = vmatprep.subr.mxu0 0.0
    %1155 = vmatpush1.xpose.msra.mxu0 0.0
    %1156 = vmatprep.subr.mxu0 0.0
    %1157 = vmatpush1.xpose.msra.mxu0 0.0
    %1158 = vmatprep.subr.mxu0 0.0
    %1159 = vmatpush1.xpose.msra.mxu0 0.0
    %1160 = vmatprep.subr.mxu0 0.0
    %1161 = vmatpush1.xpose.msra.mxu0 0.0
    %1162 = vmatprep.subr.mxu0 0.0
    %1163 = vmatpush1.xpose.msra.mxu0 0.0
    %1164 = vmatprep.subr.mxu0 0.0
    %1165 = vmatpush1.xpose.msra.mxu0 0.0
    %1166 = vmatprep.subr.mxu0 0.0
    %1167 = vmatpush1.xpose.msra.mxu0 0.0
    %1168 = vmatprep.subr.mxu0 0.0
    %1169 = vmatpush1.xpose.msra.mxu0 0.0
    %1170 = vmatprep.subr.mxu0 0.0
    %1171 = vmatpush1.xpose.msra.mxu0 0.0
    %1172 = vmatprep.subr.mxu0 0.0
    %1173 = vmatpush1.xpose.msra.mxu0 0.0
    %1174 = vmatprep.subr.mxu0 0.0
    %1175 = vmatpush1.xpose.msra.mxu0 0.0
    %1176 = vmatprep.subr.mxu0 0.0
    %1177 = vmatpush1.xpose.msra.mxu0 0.0
    %1178 = vmatprep.subr.mxu0 0.0
    %1179 = vmatpush1.xpose.msra.mxu0 0.0
    %1180 = vmatprep.subr.mxu0 0.0
    %1181 = vmatpush1.xpose.msra.mxu0 0.0
    %1182 = vmatprep.subr.mxu0 0.0
    %1183 = vmatpush1.xpose.msra.mxu0 0.0
    %1184 = vmatprep.subr.mxu0 0.0
    %1185 = vmatpush1.xpose.msra.mxu0 0.0
    %1186 = vmatprep.subr.mxu0 0.0
    %1187 = vmatpush1.xpose.msra.mxu0 0.0
    %1188 = vmatprep.subr.mxu0 0.0
    %1189 = vmatpush1.xpose.msra.mxu0 0.0
    %1190 = vmatprep.subr.mxu0 0.0
    %1191 = vmatpush1.xpose.msra.mxu0 0.0
    %1192 = vmatprep.subr.mxu0 0.0
    %1193 = vmatpush1.xpose.msra.mxu0 0.0
    %1194 = vmatprep.subr.mxu0 0.0
    %1195 = vmatpush1.xpose.msra.mxu0 0.0
    %1196 = vmatprep.subr.mxu0 0.0
    %1197 = vmatpush1.xpose.msra.mxu0 0.0
    %1198 = vmatprep.subr.mxu0 0.0
    %1199 = vmatpush1.xpose.msra.mxu0 0.0
    %1200 = vmatprep.subr.mxu0 0.0
    %1201 = vmatpush1.xpose.msra.mxu0 0.0
    %1202 = vmatprep.subr.mxu0 0.0
    %1203 = vmatpush1.xpose.msra.mxu0 0.0
    %1204 = vmatprep.subr.mxu0 0.0
    %1205 = vmatpush1.xpose.msra.mxu0 0.0
    %1206 = vmatprep.subr.mxu0 0.0
    %1207 = vmatpush1.xpose.msra.mxu0 0.0
    %1208 = vmatprep.subr.mxu0 0.0
    %1209 = vmatpush1.xpose.msra.mxu0 0.0
    %1210 = vmatprep.subr.mxu0 0.0
    %1211 = vmatpush1.xpose.msra.mxu0 0.0
    %1212 = vmatprep.subr.mxu0 0.0
    %1213 = vmatpush1.xpose.msra.mxu0 0.0
    %1214 = vmatprep.mubr.f32.mxu0 0.0
    %1215 = vmatmul.mubr.f32.gmra.mrb[0].mxu0 %v1146
    %v1216 = vpop.f32.mrb[0].mxu0
    %v1217 = vadd.f32 0.0, %v1216
    %v1218 = vpop.f32.mrb[0].mxu0
    %1219 = vdwg.mxu0
    %1220 = vrot.lane.b32.xlu0 %v229, 112
    %v1221 = vpop.permute.xlu0 %1220
    %1222 = vrot.lane.b32.xlu0 %v331, 112
    %v1223 = vpop.permute.xlu0 %1222
    %v1224 = vsel %vm447, %v1221, 0
    %v1226 = vsel %vm447, %v1223, 0
    %1228 = vmatprep.subr.mxu0 0.0
    %1229 = vmatpush1.xpose.msra.mxu0 %v1226
    %1230 = vmatprep.subr.mxu0 0.0
    %1231 = vmatpush1.xpose.msra.mxu0 0.0
    %1232 = vmatprep.subr.mxu0 0.0
    %1233 = vmatpush1.xpose.msra.mxu0 0.0
    %1234 = vmatprep.subr.mxu0 0.0
    %1235 = vmatpush1.xpose.msra.mxu0 0.0
    %1236 = vmatprep.subr.mxu0 0.0
    %1237 = vmatpush1.xpose.msra.mxu0 0.0
    %1238 = vmatprep.subr.mxu0 0.0
    %1239 = vmatpush1.xpose.msra.mxu0 0.0
    %1240 = vmatprep.subr.mxu0 0.0
    %1241 = vmatpush1.xpose.msra.mxu0 0.0
    %1242 = vmatprep.subr.mxu0 0.0
    %1243 = vmatpush1.xpose.msra.mxu0 0.0
    %1244 = vmatprep.subr.mxu0 0.0
    %1245 = vmatpush1.xpose.msra.mxu0 0.0
    %1246 = vmatprep.subr.mxu0 0.0
    %1247 = vmatpush1.xpose.msra.mxu0 0.0
    %1248 = vmatprep.subr.mxu0 0.0
    %1249 = vmatpush1.xpose.msra.mxu0 0.0
    %1250 = vmatprep.subr.mxu0 0.0
    %1251 = vmatpush1.xpose.msra.mxu0 0.0
    %1252 = vmatprep.subr.mxu0 0.0
    %1253 = vmatpush1.xpose.msra.mxu0 0.0
    %1254 = vmatprep.subr.mxu0 0.0
    %1255 = vmatpush1.xpose.msra.mxu0 0.0
    %1256 = vmatprep.subr.mxu0 0.0
    %1257 = vmatpush1.xpose.msra.mxu0 0.0
    %1258 = vmatprep.subr.mxu0 0.0
    %1259 = vmatpush1.xpose.msra.mxu0 0.0
    %1260 = vmatprep.subr.mxu0 0.0
    %1261 = vmatpush1.xpose.msra.mxu0 0.0
    %1262 = vmatprep.subr.mxu0 0.0
    %1263 = vmatpush1.xpose.msra.mxu0 0.0
    %1264 = vmatprep.subr.mxu0 0.0
    %1265 = vmatpush1.xpose.msra.mxu0 0.0
    %1266 = vmatprep.subr.mxu0 0.0
    %1267 = vmatpush1.xpose.msra.mxu0 0.0
    %1268 = vmatprep.subr.mxu0 0.0
    %1269 = vmatpush1.xpose.msra.mxu0 0.0
    %1270 = vmatprep.subr.mxu0 0.0
    %1271 = vmatpush1.xpose.msra.mxu0 0.0
    %1272 = vmatprep.subr.mxu0 0.0
    %1273 = vmatpush1.xpose.msra.mxu0 0.0
    %1274 = vmatprep.subr.mxu0 0.0
    %1275 = vmatpush1.xpose.msra.mxu0 0.0
    %1276 = vmatprep.subr.mxu0 0.0
    %1277 = vmatpush1.xpose.msra.mxu0 0.0
    %1278 = vmatprep.subr.mxu0 0.0
    %1279 = vmatpush1.xpose.msra.mxu0 0.0
    %1280 = vmatprep.subr.mxu0 0.0
    %1281 = vmatpush1.xpose.msra.mxu0 0.0
    %1282 = vmatprep.subr.mxu0 0.0
    %1283 = vmatpush1.xpose.msra.mxu0 0.0
    %1284 = vmatprep.subr.mxu0 0.0
    %1285 = vmatpush1.xpose.msra.mxu0 0.0
    %1286 = vmatprep.subr.mxu0 0.0
    %1287 = vmatpush1.xpose.msra.mxu0 0.0
    %1288 = vmatprep.subr.mxu0 0.0
    %1289 = vmatpush1.xpose.msra.mxu0 0.0
    %1290 = vmatprep.subr.mxu0 0.0
    %1291 = vmatpush1.xpose.msra.mxu0 0.0
    %1292 = vmatprep.mubr.f32.mxu0 0.0
    %1293 = vmatmul.mubr.f32.gmra.mrb[0].mxu0 %v1224
    %v1294 = vpop.f32.mrb[0].mxu0
    %v1295 = vadd.f32 0.0, %v1294
    %v1296 = vpop.f32.mrb[0].mxu0
    %1297 = vdwg.mxu0
    %1298 = vrot.lane.b32.xlu0 %v230, 112
    %v1299 = vpop.permute.xlu0 %1298
    %1300 = vrot.lane.b32.xlu0 %v336, 112
    %v1301 = vpop.permute.xlu0 %1300
    %v1302 = vsel %vm447, %v1299, 0
    %v1304 = vsel %vm447, %v1301, 0
    %1306 = vmatprep.subr.mxu0 0.0
    %1307 = vmatpush1.xpose.msra.mxu0 %v1304
    %1308 = vmatprep.subr.mxu0 0.0
    %1309 = vmatpush1.xpose.msra.mxu0 0.0
    %1310 = vmatprep.subr.mxu0 0.0
    %1311 = vmatpush1.xpose.msra.mxu0 0.0
    %1312 = vmatprep.subr.mxu0 0.0
    %1313 = vmatpush1.xpose.msra.mxu0 0.0
    %1314 = vmatprep.subr.mxu0 0.0
    %1315 = vmatpush1.xpose.msra.mxu0 0.0
    %1316 = vmatprep.subr.mxu0 0.0
    %1317 = vmatpush1.xpose.msra.mxu0 0.0
    %1318 = vmatprep.subr.mxu0 0.0
    %1319 = vmatpush1.xpose.msra.mxu0 0.0
    %1320 = vmatprep.subr.mxu0 0.0
    %1321 = vmatpush1.xpose.msra.mxu0 0.0
    %1322 = vmatprep.subr.mxu0 0.0
    %1323 = vmatpush1.xpose.msra.mxu0 0.0
    %1324 = vmatprep.subr.mxu0 0.0
    %1325 = vmatpush1.xpose.msra.mxu0 0.0
    %1326 = vmatprep.subr.mxu0 0.0
    %1327 = vmatpush1.xpose.msra.mxu0 0.0
    %1328 = vmatprep.subr.mxu0 0.0
    %1329 = vmatpush1.xpose.msra.mxu0 0.0
    %1330 = vmatprep.subr.mxu0 0.0
    %1331 = vmatpush1.xpose.msra.mxu0 0.0
    %1332 = vmatprep.subr.mxu0 0.0
    %1333 = vmatpush1.xpose.msra.mxu0 0.0
    %1334 = vmatprep.subr.mxu0 0.0
    %1335 = vmatpush1.xpose.msra.mxu0 0.0
    %1336 = vmatprep.subr.mxu0 0.0
    %1337 = vmatpush1.xpose.msra.mxu0 0.0
    %1338 = vmatprep.subr.mxu0 0.0
    %1339 = vmatpush1.xpose.msra.mxu0 0.0
    %1340 = vmatprep.subr.mxu0 0.0
    %1341 = vmatpush1.xpose.msra.mxu0 0.0
    %1342 = vmatprep.subr.mxu0 0.0
    %1343 = vmatpush1.xpose.msra.mxu0 0.0
    %1344 = vmatprep.subr.mxu0 0.0
    %1345 = vmatpush1.xpose.msra.mxu0 0.0
    %1346 = vmatprep.subr.mxu0 0.0
    %1347 = vmatpush1.xpose.msra.mxu0 0.0
    %1348 = vmatprep.subr.mxu0 0.0
    %1349 = vmatpush1.xpose.msra.mxu0 0.0
    %1350 = vmatprep.subr.mxu0 0.0
    %1351 = vmatpush1.xpose.msra.mxu0 0.0
    %1352 = vmatprep.subr.mxu0 0.0
    %1353 = vmatpush1.xpose.msra.mxu0 0.0
    %1354 = vmatprep.subr.mxu0 0.0
    %1355 = vmatpush1.xpose.msra.mxu0 0.0
    %1356 = vmatprep.subr.mxu0 0.0
    %1357 = vmatpush1.xpose.msra.mxu0 0.0
    %1358 = vmatprep.subr.mxu0 0.0
    %1359 = vmatpush1.xpose.msra.mxu0 0.0
    %1360 = vmatprep.subr.mxu0 0.0
    %1361 = vmatpush1.xpose.msra.mxu0 0.0
    %1362 = vmatprep.subr.mxu0 0.0
    %1363 = vmatpush1.xpose.msra.mxu0 0.0
    %1364 = vmatprep.subr.mxu0 0.0
    %1365 = vmatpush1.xpose.msra.mxu0 0.0
    %1366 = vmatprep.subr.mxu0 0.0
    %1367 = vmatpush1.xpose.msra.mxu0 0.0
    %1368 = vmatprep.subr.mxu0 0.0
    %1369 = vmatpush1.xpose.msra.mxu0 0.0
    %1370 = vmatprep.mubr.f32.mxu0 0.0
    %1371 = vmatmul.mubr.f32.gmra.mrb[0].mxu0 %v1302
    %v1372 = vpop.f32.mrb[0].mxu0
    %v1373 = vadd.f32 0.0, %v1372
    %v1374 = vpop.f32.mrb[0].mxu0
    %1375 = vdwg.mxu0
    %1376 = vrot.lane.b32.xlu0 %v227, 104
    %v1377 = vpop.permute.xlu0 %1376
    %1378 = vrot.lane.b32.xlu0 %v321, 104
    %v1379 = vpop.permute.xlu0 %1378
    %v1380 = vsel %vm447, %v1377, 0
    %v1382 = vsel %vm447, %v1379, 0
    %1384 = vmatprep.subr.mxu0 0.0
    %1385 = vmatpush1.xpose.msra.mxu0 %v1382
    %1386 = vmatprep.subr.mxu0 0.0
    %1387 = vmatpush1.xpose.msra.mxu0 0.0
    %1388 = vmatprep.subr.mxu0 0.0
    %1389 = vmatpush1.xpose.msra.mxu0 0.0
    %1390 = vmatprep.subr.mxu0 0.0
    %1391 = vmatpush1.xpose.msra.mxu0 0.0
    %1392 = vmatprep.subr.mxu0 0.0
    %1393 = vmatpush1.xpose.msra.mxu0 0.0
    %1394 = vmatprep.subr.mxu0 0.0
    %1395 = vmatpush1.xpose.msra.mxu0 0.0
    %1396 = vmatprep.subr.mxu0 0.0
    %1397 = vmatpush1.xpose.msra.mxu0 0.0
    %1398 = vmatprep.subr.mxu0 0.0
    %1399 = vmatpush1.xpose.msra.mxu0 0.0
    %1400 = vmatprep.subr.mxu0 0.0
    %1401 = vmatpush1.xpose.msra.mxu0 0.0
    %1402 = vmatprep.subr.mxu0 0.0
    %1403 = vmatpush1.xpose.msra.mxu0 0.0
    %1404 = vmatprep.subr.mxu0 0.0
    %1405 = vmatpush1.xpose.msra.mxu0 0.0
    %1406 = vmatprep.subr.mxu0 0.0
    %1407 = vmatpush1.xpose.msra.mxu0 0.0
    %1408 = vmatprep.subr.mxu0 0.0
    %1409 = vmatpush1.xpose.msra.mxu0 0.0
    %1410 = vmatprep.subr.mxu0 0.0
    %1411 = vmatpush1.xpose.msra.mxu0 0.0
    %1412 = vmatprep.subr.mxu0 0.0
    %1413 = vmatpush1.xpose.msra.mxu0 0.0
    %1414 = vmatprep.subr.mxu0 0.0
    %1415 = vmatpush1.xpose.msra.mxu0 0.0
    %1416 = vmatprep.subr.mxu0 0.0
    %1417 = vmatpush1.xpose.msra.mxu0 0.0
    %1418 = vmatprep.subr.mxu0 0.0
    %1419 = vmatpush1.xpose.msra.mxu0 0.0
    %1420 = vmatprep.subr.mxu0 0.0
    %1421 = vmatpush1.xpose.msra.mxu0 0.0
    %1422 = vmatprep.subr.mxu0 0.0
    %1423 = vmatpush1.xpose.msra.mxu0 0.0
    %1424 = vmatprep.subr.mxu0 0.0
    %1425 = vmatpush1.xpose.msra.mxu0 0.0
    %1426 = vmatprep.subr.mxu0 0.0
    %1427 = vmatpush1.xpose.msra.mxu0 0.0
    %1428 = vmatprep.subr.mxu0 0.0
    %1429 = vmatpush1.xpose.msra.mxu0 0.0
    %1430 = vmatprep.subr.mxu0 0.0
    %1431 = vmatpush1.xpose.msra.mxu0 0.0
    %1432 = vmatprep.subr.mxu0 0.0
    %1433 = vmatpush1.xpose.msra.mxu0 0.0
    %1434 = vmatprep.subr.mxu0 0.0
    %1435 = vmatpush1.xpose.msra.mxu0 0.0
    %1436 = vmatprep.subr.mxu0 0.0
    %1437 = vmatpush1.xpose.msra.mxu0 0.0
    %1438 = vmatprep.subr.mxu0 0.0
    %1439 = vmatpush1.xpose.msra.mxu0 0.0
    %1440 = vmatprep.subr.mxu0 0.0
    %1441 = vmatpush1.xpose.msra.mxu0 0.0
    %1442 = vmatprep.subr.mxu0 0.0
    %1443 = vmatpush1.xpose.msra.mxu0 0.0
    %1444 = vmatprep.subr.mxu0 0.0
    %1445 = vmatpush1.xpose.msra.mxu0 0.0
    %1446 = vmatprep.subr.mxu0 0.0
    %1447 = vmatpush1.xpose.msra.mxu0 0.0
    %1448 = vmatprep.mubr.f32.mxu0 0.0
    %1449 = vmatmul.mubr.f32.gmra.mrb[0].mxu0 %v1380
    %v1450 = vpop.f32.mrb[0].mxu0
    %v1451 = vadd.f32 0.0, %v1450
    %v1452 = vpop.f32.mrb[0].mxu0
    %1453 = vdwg.mxu0
    %1454 = vrot.lane.b32.xlu0 %v228, 104
    %v1455 = vpop.permute.xlu0 %1454
    %1456 = vrot.lane.b32.xlu0 %v326, 104
    %v1457 = vpop.permute.xlu0 %1456
    %v1458 = vsel %vm447, %v1455, 0
    %v1460 = vsel %vm447, %v1457, 0
    %1462 = vmatprep.subr.mxu0 0.0
    %1463 = vmatpush1.xpose.msra.mxu0 %v1460
    %1464 = vmatprep.subr.mxu0 0.0
    %1465 = vmatpush1.xpose.msra.mxu0 0.0
    %1466 = vmatprep.subr.mxu0 0.0
    %1467 = vmatpush1.xpose.msra.mxu0 0.0
    %1468 = vmatprep.subr.mxu0 0.0
    %1469 = vmatpush1.xpose.msra.mxu0 0.0
    %1470 = vmatprep.subr.mxu0 0.0
    %1471 = vmatpush1.xpose.msra.mxu0 0.0
    %1472 = vmatprep.subr.mxu0 0.0
    %1473 = vmatpush1.xpose.msra.mxu0 0.0
    %1474 = vmatprep.subr.mxu0 0.0
    %1475 = vmatpush1.xpose.msra.mxu0 0.0
    %1476 = vmatprep.subr.mxu0 0.0
    %1477 = vmatpush1.xpose.msra.mxu0 0.0
    %1478 = vmatprep.subr.mxu0 0.0
    %1479 = vmatpush1.xpose.msra.mxu0 0.0
    %1480 = vmatprep.subr.mxu0 0.0
    %1481 = vmatpush1.xpose.msra.mxu0 0.0
    %1482 = vmatprep.subr.mxu0 0.0
    %1483 = vmatpush1.xpose.msra.mxu0 0.0
    %1484 = vmatprep.subr.mxu0 0.0
    %1485 = vmatpush1.xpose.msra.mxu0 0.0
    %1486 = vmatprep.subr.mxu0 0.0
    %1487 = vmatpush1.xpose.msra.mxu0 0.0
    %1488 = vmatprep.subr.mxu0 0.0
    %1489 = vmatpush1.xpose.msra.mxu0 0.0
    %1490 = vmatprep.subr.mxu0 0.0
    %1491 = vmatpush1.xpose.msra.mxu0 0.0
    %1492 = vmatprep.subr.mxu0 0.0
    %1493 = vmatpush1.xpose.msra.mxu0 0.0
    %1494 = vmatprep.subr.mxu0 0.0
    %1495 = vmatpush1.xpose.msra.mxu0 0.0
    %1496 = vmatprep.subr.mxu0 0.0
    %1497 = vmatpush1.xpose.msra.mxu0 0.0
    %1498 = vmatprep.subr.mxu0 0.0
    %1499 = vmatpush1.xpose.msra.mxu0 0.0
    %1500 = vmatprep.subr.mxu0 0.0
    %1501 = vmatpush1.xpose.msra.mxu0 0.0
    %1502 = vmatprep.subr.mxu0 0.0
    %1503 = vmatpush1.xpose.msra.mxu0 0.0
    %1504 = vmatprep.subr.mxu0 0.0
    %1505 = vmatpush1.xpose.msra.mxu0 0.0
    %1506 = vmatprep.subr.mxu0 0.0
    %1507 = vmatpush1.xpose.msra.mxu0 0.0
    %1508 = vmatprep.subr.mxu0 0.0
    %1509 = vmatpush1.xpose.msra.mxu0 0.0
    %1510 = vmatprep.subr.mxu0 0.0
    %1511 = vmatpush1.xpose.msra.mxu0 0.0
    %1512 = vmatprep.subr.mxu0 0.0
    %1513 = vmatpush1.xpose.msra.mxu0 0.0
    %1514 = vmatprep.subr.mxu0 0.0
    %1515 = vmatpush1.xpose.msra.mxu0 0.0
    %1516 = vmatprep.subr.mxu0 0.0
    %1517 = vmatpush1.xpose.msra.mxu0 0.0
    %1518 = vmatprep.subr.mxu0 0.0
    %1519 = vmatpush1.xpose.msra.mxu0 0.0
    %1520 = vmatprep.subr.mxu0 0.0
    %1521 = vmatpush1.xpose.msra.mxu0 0.0
    %1522 = vmatprep.subr.mxu0 0.0
    %1523 = vmatpush1.xpose.msra.mxu0 0.0
    %1524 = vmatprep.subr.mxu0 0.0
    %1525 = vmatpush1.xpose.msra.mxu0 0.0
    %1526 = vmatprep.mubr.f32.mxu0 0.0
    %1527 = vmatmul.mubr.f32.gmra.mrb[0].mxu0 %v1458
    %v1528 = vpop.f32.mrb[0].mxu0
    %v1529 = vadd.f32 0.0, %v1528
    %v1530 = vpop.f32.mrb[0].mxu0
    %1531 = vdwg.mxu0
    %1532 = vrot.lane.b32.xlu0 %v229, 104
    %v1533 = vpop.permute.xlu0 %1532
    %1534 = vrot.lane.b32.xlu0 %v331, 104
    %v1535 = vpop.permute.xlu0 %1534
    %v1536 = vsel %vm447, %v1533, 0
    %v1538 = vsel %vm447, %v1535, 0
    %1540 = vmatprep.subr.mxu0 0.0
    %1541 = vmatpush1.xpose.msra.mxu0 %v1538
    %1542 = vmatprep.subr.mxu0 0.0
    %1543 = vmatpush1.xpose.msra.mxu0 0.0
    %1544 = vmatprep.subr.mxu0 0.0
    %1545 = vmatpush1.xpose.msra.mxu0 0.0
    %1546 = vmatprep.subr.mxu0 0.0
    %1547 = vmatpush1.xpose.msra.mxu0 0.0
    %1548 = vmatprep.subr.mxu0 0.0
    %1549 = vmatpush1.xpose.msra.mxu0 0.0
    %1550 = vmatprep.subr.mxu0 0.0
    %1551 = vmatpush1.xpose.msra.mxu0 0.0
    %1552 = vmatprep.subr.mxu0 0.0
    %1553 = vmatpush1.xpose.msra.mxu0 0.0
    %1554 = vmatprep.subr.mxu0 0.0
    %1555 = vmatpush1.xpose.msra.mxu0 0.0
    %1556 = vmatprep.subr.mxu0 0.0
    %1557 = vmatpush1.xpose.msra.mxu0 0.0
    %1558 = vmatprep.subr.mxu0 0.0
    %1559 = vmatpush1.xpose.msra.mxu0 0.0
    %1560 = vmatprep.subr.mxu0 0.0
    %1561 = vmatpush1.xpose.msra.mxu0 0.0
    %1562 = vmatprep.subr.mxu0 0.0
    %1563 = vmatpush1.xpose.msra.mxu0 0.0
    %1564 = vmatprep.subr.mxu0 0.0
    %1565 = vmatpush1.xpose.msra.mxu0 0.0
    %1566 = vmatprep.subr.mxu0 0.0
    %1567 = vmatpush1.xpose.msra.mxu0 0.0
    %1568 = vmatprep.subr.mxu0 0.0
    %1569 = vmatpush1.xpose.msra.mxu0 0.0
    %1570 = vmatprep.subr.mxu0 0.0
    %1571 = vmatpush1.xpose.msra.mxu0 0.0
    %1572 = vmatprep.subr.mxu0 0.0
    %1573 = vmatpush1.xpose.msra.mxu0 0.0
    %1574 = vmatprep.subr.mxu0 0.0
    %1575 = vmatpush1.xpose.msra.mxu0 0.0
    %1576 = vmatprep.subr.mxu0 0.0
    %1577 = vmatpush1.xpose.msra.mxu0 0.0
    %1578 = vmatprep.subr.mxu0 0.0
    %1579 = vmatpush1.xpose.msra.mxu0 0.0
    %1580 = vmatprep.subr.mxu0 0.0
    %1581 = vmatpush1.xpose.msra.mxu0 0.0
    %1582 = vmatprep.subr.mxu0 0.0
    %1583 = vmatpush1.xpose.msra.mxu0 0.0
    %1584 = vmatprep.subr.mxu0 0.0
    %1585 = vmatpush1.xpose.msra.mxu0 0.0
    %1586 = vmatprep.subr.mxu0 0.0
    %1587 = vmatpush1.xpose.msra.mxu0 0.0
    %1588 = vmatprep.subr.mxu0 0.0
    %1589 = vmatpush1.xpose.msra.mxu0 0.0
    %1590 = vmatprep.subr.mxu0 0.0
    %1591 = vmatpush1.xpose.msra.mxu0 0.0
    %1592 = vmatprep.subr.mxu0 0.0
    %1593 = vmatpush1.xpose.msra.mxu0 0.0
    %1594 = vmatprep.subr.mxu0 0.0
    %1595 = vmatpush1.xpose.msra.mxu0 0.0
    %1596 = vmatprep.subr.mxu0 0.0
    %1597 = vmatpush1.xpose.msra.mxu0 0.0
    %1598 = vmatprep.subr.mxu0 0.0
    %1599 = vmatpush1.xpose.msra.mxu0 0.0
    %1600 = vmatprep.subr.mxu0 0.0
    %1601 = vmatpush1.xpose.msra.mxu0 0.0
    %1602 = vmatprep.subr.mxu0 0.0
    %1603 = vmatpush1.xpose.msra.mxu0 0.0
    %1604 = vmatprep.mubr.f32.mxu0 0.0
    %1605 = vmatmul.mubr.f32.gmra.mrb[0].mxu0 %v1536
    %v1606 = vpop.f32.mrb[0].mxu0
    %v1607 = vadd.f32 0.0, %v1606
    %v1608 = vpop.f32.mrb[0].mxu0
    %1609 = vdwg.mxu0
    %1610 = vrot.lane.b32.xlu0 %v230, 104
    %v1611 = vpop.permute.xlu0 %1610
    %1612 = vrot.lane.b32.xlu0 %v336, 104
    %v1613 = vpop.permute.xlu0 %1612
    %v1614 = vsel %vm447, %v1611, 0
    %v1616 = vsel %vm447, %v1613, 0
    %1618 = vmatprep.subr.mxu0 0.0
    %1619 = vmatpush1.xpose.msra.mxu0 %v1616
    %1620 = vmatprep.subr.mxu0 0.0
    %1621 = vmatpush1.xpose.msra.mxu0 0.0
    %1622 = vmatprep.subr.mxu0 0.0
    %1623 = vmatpush1.xpose.msra.mxu0 0.0
    %1624 = vmatprep.subr.mxu0 0.0
    %1625 = vmatpush1.xpose.msra.mxu0 0.0
    %1626 = vmatprep.subr.mxu0 0.0
    %1627 = vmatpush1.xpose.msra.mxu0 0.0
    %1628 = vmatprep.subr.mxu0 0.0
    %1629 = vmatpush1.xpose.msra.mxu0 0.0
    %1630 = vmatprep.subr.mxu0 0.0
    %1631 = vmatpush1.xpose.msra.mxu0 0.0
    %1632 = vmatprep.subr.mxu0 0.0
    %1633 = vmatpush1.xpose.msra.mxu0 0.0
    %1634 = vmatprep.subr.mxu0 0.0
    %1635 = vmatpush1.xpose.msra.mxu0 0.0
    %1636 = vmatprep.subr.mxu0 0.0
    %1637 = vmatpush1.xpose.msra.mxu0 0.0
    %1638 = vmatprep.subr.mxu0 0.0
    %1639 = vmatpush1.xpose.msra.mxu0 0.0
    %1640 = vmatprep.subr.mxu0 0.0
    %1641 = vmatpush1.xpose.msra.mxu0 0.0
    %1642 = vmatprep.subr.mxu0 0.0
    %1643 = vmatpush1.xpose.msra.mxu0 0.0
    %1644 = vmatprep.subr.mxu0 0.0
    %1645 = vmatpush1.xpose.msra.mxu0 0.0
    %1646 = vmatprep.subr.mxu0 0.0
    %1647 = vmatpush1.xpose.msra.mxu0 0.0
    %1648 = vmatprep.subr.mxu0 0.0
    %1649 = vmatpush1.xpose.msra.mxu0 0.0
    %1650 = vmatprep.subr.mxu0 0.0
    %1651 = vmatpush1.xpose.msra.mxu0 0.0
    %1652 = vmatprep.subr.mxu0 0.0
    %1653 = vmatpush1.xpose.msra.mxu0 0.0
    %1654 = vmatprep.subr.mxu0 0.0
    %1655 = vmatpush1.xpose.msra.mxu0 0.0
    %1656 = vmatprep.subr.mxu0 0.0
    %1657 = vmatpush1.xpose.msra.mxu0 0.0
    %1658 = vmatprep.subr.mxu0 0.0
    %1659 = vmatpush1.xpose.msra.mxu0 0.0
    %1660 = vmatprep.subr.mxu0 0.0
    %1661 = vmatpush1.xpose.msra.mxu0 0.0
    %1662 = vmatprep.subr.mxu0 0.0
    %1663 = vmatpush1.xpose.msra.mxu0 0.0
    %1664 = vmatprep.subr.mxu0 0.0
    %1665 = vmatpush1.xpose.msra.mxu0 0.0
    %1666 = vmatprep.subr.mxu0 0.0
    %1667 = vmatpush1.xpose.msra.mxu0 0.0
    %1668 = vmatprep.subr.mxu0 0.0
    %1669 = vmatpush1.xpose.msra.mxu0 0.0
    %1670 = vmatprep.subr.mxu0 0.0
    %1671 = vmatpush1.xpose.msra.mxu0 0.0
    %1672 = vmatprep.subr.mxu0 0.0
    %1673 = vmatpush1.xpose.msra.mxu0 0.0
    %1674 = vmatprep.subr.mxu0 0.0
    %1675 = vmatpush1.xpose.msra.mxu0 0.0
    %1676 = vmatprep.subr.mxu0 0.0
    %1677 = vmatpush1.xpose.msra.mxu0 0.0
    %1678 = vmatprep.subr.mxu0 0.0
    %1679 = vmatpush1.xpose.msra.mxu0 0.0
    %1680 = vmatprep.subr.mxu0 0.0
    %1681 = vmatpush1.xpose.msra.mxu0 0.0
    %1682 = vmatprep.mubr.f32.mxu0 0.0
    %1683 = vmatmul.mubr.f32.gmra.mrb[0].mxu0 %v1614
    %v1684 = vpop.f32.mrb[0].mxu0
    %v1685 = vadd.f32 0.0, %v1684
    %v1686 = vpop.f32.mrb[0].mxu0
    %1687 = vdwg.mxu0
    %1692 = vrot.lane.b32.xlu0 %v827, 8
    %v1693 = vpop.permute.xlu0 %1692
    %1694 = vrot.lane.b32.xlu0 %v905, 8
    %v1695 = vpop.permute.xlu0 %1694
    %1696 = vrot.lane.b32.xlu0 %v983, 8
    %v1697 = vpop.permute.xlu0 %1696
    %1698 = vrot.lane.b32.xlu0 %v1061, 8
    %v1699 = vpop.permute.xlu0 %1698
    %1708 = vrot.lane.b32.xlu0 %v1139, 16
    %v1709 = vpop.permute.xlu0 %1708
    %1710 = vrot.lane.b32.xlu0 %v1217, 16
    %v1711 = vpop.permute.xlu0 %1710
    %1712 = vrot.lane.b32.xlu0 %v1295, 16
    %v1713 = vpop.permute.xlu0 %1712
    %1714 = vrot.lane.b32.xlu0 %v1373, 16
    %v1715 = vpop.permute.xlu0 %1714
    %1724 = vrot.lane.b32.xlu0 %v1451, 24
    %v1725 = vpop.permute.xlu0 %1724
    %1726 = vrot.lane.b32.xlu0 %v1529, 24
    %v1727 = vpop.permute.xlu0 %1726
    %1728 = vrot.lane.b32.xlu0 %v1607, 24
    %v1729 = vpop.permute.xlu0 %1728
    %1730 = vrot.lane.b32.xlu0 %v1685, 24
    %v1731 = vpop.permute.xlu0 %1730
    %v1736 = vsel %vm447, %v521, %v1693
    %v1737 = vsel %vm447, %v597, %v1695
    %v1738 = vsel %vm447, %v673, %v1697
    %v1739 = vsel %vm447, %v749, %v1699
    %vm1740 = vcmask 130048
    %v1741 = vsel %vm1740, %v1736, %v1709
    %v1742 = vsel %vm1740, %v1737, %v1711
    %v1743 = vsel %vm1740, %v1738, %v1713
    %v1744 = vsel %vm1740, %v1739, %v1715
    %vm1745 = vcmask 195584
    %v1746 = vsel %vm1745, %v1741, %v1725
    %v1747 = vsel %vm1745, %v1742, %v1727
    %v1748 = vsel %vm1745, %v1743, %v1729
    %v1749 = vsel %vm1745, %v1744, %v1731
    %v1750 = vsel %vm129, %v1746, -inf
    %v1751 = vsel %vm129, %v1748, -inf
    %v1752 = vmax.f32 %v1750, %v1751
    %v1753 = vsel %vm129, %v1747, -inf
    %v1754 = vsel %vm129, %v1749, -inf
    %v1755 = vmax.f32 %v1753, %v1754
    %v1756 = vsub.f32 %v1746, %v1752
    %v1757 = vsub.f32 %v1747, %v1755
    %v1758 = vsub.f32 %v1748, %v1752
    %v1759 = vsub.f32 %v1749, %v1755
    %v1760 = vmul.f32 %v1756, 1.442695
    %v1761 = vpow.pop %v1760
    %v1762 = vmul.f32 %v1757, 1.442695
    %v1763 = vpow.pop %v1762
    %v1764 = vmul.f32 %v1758, 1.442695
    %v1765 = vpow.pop %v1764
    %v1766 = vmul.f32 %v1759, 1.442695
    %v1767 = vpow.pop %v1766
    %v1768 = vsel %vm129, %v1761, 0.0
    %v1769 = vsel %vm129, %v1765, 0.0
    %v1770 = vadd.f32 %v1768, %v1769
    %v1771 = vsel %vm129, %v1763, 0.0
    %v1772 = vsel %vm129, %v1767, 0.0
    %v1773 = vadd.f32 %v1771, %v1772
    %v1774 = vrcp.pop %v1770
    %v1775 = vmul.f32 1.0, %v1774
    %v1776 = vrcp.pop %v1773
    %v1777 = vmul.f32 1.0, %v1776
    %v1778 = vmul.f32 %v1761, %v1775
    %v1779 = vmul.f32 %v1763, %v1777
    %v1780 = vmul.f32 %v1765, %v1775
    %v1781 = vmul.f32 %v1767, %v1777
    %1782 = vst.msk [vmem:[%s11] sm:$0xff] %vm129, %v1778
    %1783 = vst.msk [vmem:[%s11 + $0x8] sm:$0xff] %vm129, %v1779
    %1784 = vst.msk [vmem:[%s11 + $0x10] sm:$0xff] %vm129, %v1780
    %1785 = vst.msk [vmem:[%s11 + $0x18] sm:$0xff] %vm129, %v1781
    %1790 = vrot.lane.b32.xlu0 %v1778, 120
    %v1791 = vpop.permute.xlu0 %1790
    %1792 = vrot.lane.b32.xlu0 %v1779, 120
    %v1793 = vpop.permute.xlu0 %1792
    %1794 = vrot.lane.b32.xlu0 %v1780, 120
    %v1795 = vpop.permute.xlu0 %1794
    %1796 = vrot.lane.b32.xlu0 %v1781, 120
    %v1797 = vpop.permute.xlu0 %1796
    %v1802 = vadd.f32 %v1778, %v1791
    %v1803 = vadd.f32 %v1779, %v1793
    %v1804 = vadd.f32 %v1780, %v1795
    %v1805 = vadd.f32 %v1781, %v1797
    %1806 = vrot.lane.b32.xlu0 %v1778, 112
    %v1807 = vpop.permute.xlu0 %1806
    %1808 = vrot.lane.b32.xlu0 %v1779, 112
    %v1809 = vpop.permute.xlu0 %1808
    %1810 = vrot.lane.b32.xlu0 %v1780, 112
    %v1811 = vpop.permute.xlu0 %1810
    %1812 = vrot.lane.b32.xlu0 %v1781, 112
    %v1813 = vpop.permute.xlu0 %1812
    %v1818 = vadd.f32 %v1802, %v1807
    %v1819 = vadd.f32 %v1803, %v1809
    %v1820 = vadd.f32 %v1804, %v1811
    %v1821 = vadd.f32 %v1805, %v1813
    %1822 = vrot.lane.b32.xlu0 %v1778, 104
    %v1823 = vpop.permute.xlu0 %1822
    %1824 = vrot.lane.b32.xlu0 %v1779, 104
    %v1825 = vpop.permute.xlu0 %1824
    %1826 = vrot.lane.b32.xlu0 %v1780, 104
    %v1827 = vpop.permute.xlu0 %1826
    %1828 = vrot.lane.b32.xlu0 %v1781, 104
    %v1829 = vpop.permute.xlu0 %1828
    %v1834 = vadd.f32 %v1818, %v1823
    %v1835 = vadd.f32 %v1819, %v1825
    %v1836 = vadd.f32 %v1820, %v1827
    %v1837 = vadd.f32 %v1821, %v1829
    %v1839 = vsel %vm447, %v1834, 0
    %1841 = vmatprep.subr.mxu0 0.0
    %1842 = vmatpush1.msra.mxu0 %v429
    %1843 = vmatprep.subr.mxu0 0.0
    %1844 = vmatpush1.msra.mxu0 0.0
    %1845 = vmatprep.subr.mxu0 0.0
    %1846 = vmatpush1.msra.mxu0 0.0
    %1847 = vmatprep.subr.mxu0 0.0
    %1848 = vmatpush1.msra.mxu0 0.0
    %1849 = vmatprep.subr.mxu0 0.0
    %1850 = vmatpush1.msra.mxu0 0.0
    %1851 = vmatprep.subr.mxu0 0.0
    %1852 = vmatpush1.msra.mxu0 0.0
    %1853 = vmatprep.subr.mxu0 0.0
    %1854 = vmatpush1.msra.mxu0 0.0
    %1855 = vmatprep.subr.mxu0 0.0
    %1856 = vmatpush1.msra.mxu0 0.0
    %1857 = vmatprep.subr.mxu0 0.0
    %1858 = vmatpush1.msra.mxu0 0.0
    %1859 = vmatprep.subr.mxu0 0.0
    %1860 = vmatpush1.msra.mxu0 0.0
    %1861 = vmatprep.subr.mxu0 0.0
    %1862 = vmatpush1.msra.mxu0 0.0
    %1863 = vmatprep.subr.mxu0 0.0
    %1864 = vmatpush1.msra.mxu0 0.0
    %1865 = vmatprep.subr.mxu0 0.0
    %1866 = vmatpush1.msra.mxu0 0.0
    %1867 = vmatprep.subr.mxu0 0.0
    %1868 = vmatpush1.msra.mxu0 0.0
    %1869 = vmatprep.subr.mxu0 0.0
    %1870 = vmatpush1.msra.mxu0 0.0
    %1871 = vmatprep.subr.mxu0 0.0
    %1872 = vmatpush1.msra.mxu0 0.0
    %1873 = vmatprep.subr.mxu0 0.0
    %1874 = vmatpush1.msra.mxu0 0.0
    %1875 = vmatprep.subr.mxu0 0.0
    %1876 = vmatpush1.msra.mxu0 0.0
    %1877 = vmatprep.subr.mxu0 0.0
    %1878 = vmatpush1.msra.mxu0 0.0
    %1879 = vmatprep.subr.mxu0 0.0
    %1880 = vmatpush1.msra.mxu0 0.0
    %1881 = vmatprep.subr.mxu0 0.0
    %1882 = vmatpush1.msra.mxu0 0.0
    %1883 = vmatprep.subr.mxu0 0.0
    %1884 = vmatpush1.msra.mxu0 0.0
    %1885 = vmatprep.subr.mxu0 0.0
    %1886 = vmatpush1.msra.mxu0 0.0
    %1887 = vmatprep.subr.mxu0 0.0
    %1888 = vmatpush1.msra.mxu0 0.0
    %1889 = vmatprep.subr.mxu0 0.0
    %1890 = vmatpush1.msra.mxu0 0.0
    %1891 = vmatprep.subr.mxu0 0.0
    %1892 = vmatpush1.msra.mxu0 0.0
    %1893 = vmatprep.subr.mxu0 0.0
    %1894 = vmatpush1.msra.mxu0 0.0
    %1895 = vmatprep.subr.mxu0 0.0
    %1896 = vmatpush1.msra.mxu0 0.0
    %1897 = vmatprep.subr.mxu0 0.0
    %1898 = vmatpush1.msra.mxu0 0.0
    %1899 = vmatprep.subr.mxu0 0.0
    %1900 = vmatpush1.msra.mxu0 0.0
    %1901 = vmatprep.subr.mxu0 0.0
    %1902 = vmatpush1.msra.mxu0 0.0
    %1903 = vmatprep.subr.mxu0 0.0
    %1904 = vmatpush1.msra.mxu0 0.0
    %1905 = vmatprep.mubr.f32.mxu0 0.0
    %1906 = vmatmul.mubr.f32.gmra.mrb[0].mxu0 %v1839
    %v1907 = vpop.f32.mrb[0].mxu0
    %v1908 = vadd.f32 0.0, %v1907
    %v1909 = vpop.f32.mrb[0].mxu0
    %1910 = vdwg.mxu0
    %v1912 = vsel %vm447, %v1835, 0
    %1914 = vmatprep.subr.mxu0 0.0
    %1915 = vmatpush1.msra.mxu0 %v434
    %1916 = vmatprep.subr.mxu0 0.0
    %1917 = vmatpush1.msra.mxu0 0.0
    %1918 = vmatprep.subr.mxu0 0.0
    %1919 = vmatpush1.msra.mxu0 0.0
    %1920 = vmatprep.subr.mxu0 0.0
    %1921 = vmatpush1.msra.mxu0 0.0
    %1922 = vmatprep.subr.mxu0 0.0
    %1923 = vmatpush1.msra.mxu0 0.0
    %1924 = vmatprep.subr.mxu0 0.0
    %1925 = vmatpush1.msra.mxu0 0.0
    %1926 = vmatprep.subr.mxu0 0.0
    %1927 = vmatpush1.msra.mxu0 0.0
    %1928 = vmatprep.subr.mxu0 0.0
    %1929 = vmatpush1.msra.mxu0 0.0
    %1930 = vmatprep.subr.mxu0 0.0
    %1931 = vmatpush1.msra.mxu0 0.0
    %1932 = vmatprep.subr.mxu0 0.0
    %1933 = vmatpush1.msra.mxu0 0.0
    %1934 = vmatprep.subr.mxu0 0.0
    %1935 = vmatpush1.msra.mxu0 0.0
    %1936 = vmatprep.subr.mxu0 0.0
    %1937 = vmatpush1.msra.mxu0 0.0
    %1938 = vmatprep.subr.mxu0 0.0
    %1939 = vmatpush1.msra.mxu0 0.0
    %1940 = vmatprep.subr.mxu0 0.0
    %1941 = vmatpush1.msra.mxu0 0.0
    %1942 = vmatprep.subr.mxu0 0.0
    %1943 = vmatpush1.msra.mxu0 0.0
    %1944 = vmatprep.subr.mxu0 0.0
    %1945 = vmatpush1.msra.mxu0 0.0
    %1946 = vmatprep.subr.mxu0 0.0
    %1947 = vmatpush1.msra.mxu0 0.0
    %1948 = vmatprep.subr.mxu0 0.0
    %1949 = vmatpush1.msra.mxu0 0.0
    %1950 = vmatprep.subr.mxu0 0.0
    %1951 = vmatpush1.msra.mxu0 0.0
    %1952 = vmatprep.subr.mxu0 0.0
    %1953 = vmatpush1.msra.mxu0 0.0
    %1954 = vmatprep.subr.mxu0 0.0
    %1955 = vmatpush1.msra.mxu0 0.0
    %1956 = vmatprep.subr.mxu0 0.0
    %1957 = vmatpush1.msra.mxu0 0.0
    %1958 = vmatprep.subr.mxu0 0.0
    %1959 = vmatpush1.msra.mxu0 0.0
    %1960 = vmatprep.subr.mxu0 0.0
    %1961 = vmatpush1.msra.mxu0 0.0
    %1962 = vmatprep.subr.mxu0 0.0
    %1963 = vmatpush1.msra.mxu0 0.0
    %1964 = vmatprep.subr.mxu0 0.0
    %1965 = vmatpush1.msra.mxu0 0.0
    %1966 = vmatprep.subr.mxu0 0.0
    %1967 = vmatpush1.msra.mxu0 0.0
    %1968 = vmatprep.subr.mxu0 0.0
    %1969 = vmatpush1.msra.mxu0 0.0
    %1970 = vmatprep.subr.mxu0 0.0
    %1971 = vmatpush1.msra.mxu0 0.0
    %1972 = vmatprep.subr.mxu0 0.0
    %1973 = vmatpush1.msra.mxu0 0.0
    %1974 = vmatprep.subr.mxu0 0.0
    %1975 = vmatpush1.msra.mxu0 0.0
    %1976 = vmatprep.subr.mxu0 0.0
    %1977 = vmatpush1.msra.mxu0 0.0
    %1978 = vmatprep.mubr.f32.mxu0 0.0
    %1979 = vmatmul.mubr.f32.gmra.mrb[0].mxu0 %v1912
    %v1980 = vpop.f32.mrb[0].mxu0
    %v1981 = vadd.f32 0.0, %v1980
    %v1982 = vpop.f32.mrb[0].mxu0
    %1983 = vdwg.mxu0
    %v1985 = vsel %vm447, %v1836, 0
    %1987 = vmatprep.subr.mxu0 0.0
    %1988 = vmatpush1.msra.mxu0 %v439
    %1989 = vmatprep.subr.mxu0 0.0
    %1990 = vmatpush1.msra.mxu0 0.0
    %1991 = vmatprep.subr.mxu0 0.0
    %1992 = vmatpush1.msra.mxu0 0.0
    %1993 = vmatprep.subr.mxu0 0.0
    %1994 = vmatpush1.msra.mxu0 0.0
    %1995 = vmatprep.subr.mxu0 0.0
    %1996 = vmatpush1.msra.mxu0 0.0
    %1997 = vmatprep.subr.mxu0 0.0
    %1998 = vmatpush1.msra.mxu0 0.0
    %1999 = vmatprep.subr.mxu0 0.0
    %2000 = vmatpush1.msra.mxu0 0.0
    %2001 = vmatprep.subr.mxu0 0.0
    %2002 = vmatpush1.msra.mxu0 0.0
    %2003 = vmatprep.subr.mxu0 0.0
    %2004 = vmatpush1.msra.mxu0 0.0
    %2005 = vmatprep.subr.mxu0 0.0
    %2006 = vmatpush1.msra.mxu0 0.0
    %2007 = vmatprep.subr.mxu0 0.0
    %2008 = vmatpush1.msra.mxu0 0.0
    %2009 = vmatprep.subr.mxu0 0.0
    %2010 = vmatpush1.msra.mxu0 0.0
    %2011 = vmatprep.subr.mxu0 0.0
    %2012 = vmatpush1.msra.mxu0 0.0
    %2013 = vmatprep.subr.mxu0 0.0
    %2014 = vmatpush1.msra.mxu0 0.0
    %2015 = vmatprep.subr.mxu0 0.0
    %2016 = vmatpush1.msra.mxu0 0.0
    %2017 = vmatprep.subr.mxu0 0.0
    %2018 = vmatpush1.msra.mxu0 0.0
    %2019 = vmatprep.subr.mxu0 0.0
    %2020 = vmatpush1.msra.mxu0 0.0
    %2021 = vmatprep.subr.mxu0 0.0
    %2022 = vmatpush1.msra.mxu0 0.0
    %2023 = vmatprep.subr.mxu0 0.0
    %2024 = vmatpush1.msra.mxu0 0.0
    %2025 = vmatprep.subr.mxu0 0.0
    %2026 = vmatpush1.msra.mxu0 0.0
    %2027 = vmatprep.subr.mxu0 0.0
    %2028 = vmatpush1.msra.mxu0 0.0
    %2029 = vmatprep.subr.mxu0 0.0
    %2030 = vmatpush1.msra.mxu0 0.0
    %2031 = vmatprep.subr.mxu0 0.0
    %2032 = vmatpush1.msra.mxu0 0.0
    %2033 = vmatprep.subr.mxu0 0.0
    %2034 = vmatpush1.msra.mxu0 0.0
    %2035 = vmatprep.subr.mxu0 0.0
    %2036 = vmatpush1.msra.mxu0 0.0
    %2037 = vmatprep.subr.mxu0 0.0
    %2038 = vmatpush1.msra.mxu0 0.0
    %2039 = vmatprep.subr.mxu0 0.0
    %2040 = vmatpush1.msra.mxu0 0.0
    %2041 = vmatprep.subr.mxu0 0.0
    %2042 = vmatpush1.msra.mxu0 0.0
    %2043 = vmatprep.subr.mxu0 0.0
    %2044 = vmatpush1.msra.mxu0 0.0
    %2045 = vmatprep.subr.mxu0 0.0
    %2046 = vmatpush1.msra.mxu0 0.0
    %2047 = vmatprep.subr.mxu0 0.0
    %2048 = vmatpush1.msra.mxu0 0.0
    %2049 = vmatprep.subr.mxu0 0.0
    %2050 = vmatpush1.msra.mxu0 0.0
    %2051 = vmatprep.mubr.f32.mxu0 0.0
    %2052 = vmatmul.mubr.f32.gmra.mrb[0].mxu0 %v1985
    %v2053 = vpop.f32.mrb[0].mxu0
    %v2054 = vadd.f32 0.0, %v2053
    %v2055 = vpop.f32.mrb[0].mxu0
    %2056 = vdwg.mxu0
    %v2058 = vsel %vm447, %v1837, 0
    %2060 = vmatprep.subr.mxu0 0.0
    %2061 = vmatpush1.msra.mxu0 %v444
    %2062 = vmatprep.subr.mxu0 0.0
    %2063 = vmatpush1.msra.mxu0 0.0
    %2064 = vmatprep.subr.mxu0 0.0
    %2065 = vmatpush1.msra.mxu0 0.0
    %2066 = vmatprep.subr.mxu0 0.0
    %2067 = vmatpush1.msra.mxu0 0.0
    %2068 = vmatprep.subr.mxu0 0.0
    %2069 = vmatpush1.msra.mxu0 0.0
    %2070 = vmatprep.subr.mxu0 0.0
    %2071 = vmatpush1.msra.mxu0 0.0
    %2072 = vmatprep.subr.mxu0 0.0
    %2073 = vmatpush1.msra.mxu0 0.0
    %2074 = vmatprep.subr.mxu0 0.0
    %2075 = vmatpush1.msra.mxu0 0.0
    %2076 = vmatprep.subr.mxu0 0.0
    %2077 = vmatpush1.msra.mxu0 0.0
    %2078 = vmatprep.subr.mxu0 0.0
    %2079 = vmatpush1.msra.mxu0 0.0
    %2080 = vmatprep.subr.mxu0 0.0
    %2081 = vmatpush1.msra.mxu0 0.0
    %2082 = vmatprep.subr.mxu0 0.0
    %2083 = vmatpush1.msra.mxu0 0.0
    %2084 = vmatprep.subr.mxu0 0.0
    %2085 = vmatpush1.msra.mxu0 0.0
    %2086 = vmatprep.subr.mxu0 0.0
    %2087 = vmatpush1.msra.mxu0 0.0
    %2088 = vmatprep.subr.mxu0 0.0
    %2089 = vmatpush1.msra.mxu0 0.0
    %2090 = vmatprep.subr.mxu0 0.0
    %2091 = vmatpush1.msra.mxu0 0.0
    %2092 = vmatprep.subr.mxu0 0.0
    %2093 = vmatpush1.msra.mxu0 0.0
    %2094 = vmatprep.subr.mxu0 0.0
    %2095 = vmatpush1.msra.mxu0 0.0
    %2096 = vmatprep.subr.mxu0 0.0
    %2097 = vmatpush1.msra.mxu0 0.0
    %2098 = vmatprep.subr.mxu0 0.0
    %2099 = vmatpush1.msra.mxu0 0.0
    %2100 = vmatprep.subr.mxu0 0.0
    %2101 = vmatpush1.msra.mxu0 0.0
    %2102 = vmatprep.subr.mxu0 0.0
    %2103 = vmatpush1.msra.mxu0 0.0
    %2104 = vmatprep.subr.mxu0 0.0
    %2105 = vmatpush1.msra.mxu0 0.0
    %2106 = vmatprep.subr.mxu0 0.0
    %2107 = vmatpush1.msra.mxu0 0.0
    %2108 = vmatprep.subr.mxu0 0.0
    %2109 = vmatpush1.msra.mxu0 0.0
    %2110 = vmatprep.subr.mxu0 0.0
    %2111 = vmatpush1.msra.mxu0 0.0
    %2112 = vmatprep.subr.mxu0 0.0
    %2113 = vmatpush1.msra.mxu0 0.0
    %2114 = vmatprep.subr.mxu0 0.0
    %2115 = vmatpush1.msra.mxu0 0.0
    %2116 = vmatprep.subr.mxu0 0.0
    %2117 = vmatpush1.msra.mxu0 0.0
    %2118 = vmatprep.subr.mxu0 0.0
    %2119 = vmatpush1.msra.mxu0 0.0
    %2120 = vmatprep.subr.mxu0 0.0
    %2121 = vmatpush1.msra.mxu0 0.0
    %2122 = vmatprep.subr.mxu0 0.0
    %2123 = vmatpush1.msra.mxu0 0.0
    %2124 = vmatprep.mubr.f32.mxu0 0.0
    %2125 = vmatmul.mubr.f32.gmra.mrb[0].mxu0 %v2058
    %v2126 = vpop.f32.mrb[0].mxu0
    %v2127 = vadd.f32 0.0, %v2126
    %v2128 = vpop.f32.mrb[0].mxu0
    %2129 = vdwg.mxu0
    %v2130 = vmul.f32 %v1908, 0.25
    %v2131 = vmul.f32 %v1981, 0.25
    %v2132 = vmul.f32 %v2054, 0.25
    %v2133 = vmul.f32 %v2127, 0.25
    %v2134 = vld [vmem:[%s9] sm:$0xff]
    %v2136 = vsel %vm447, %v2130, 0
    %v2139 = vsel %vm447, %v2131, 0
    %v2142 = vsel %vm447, %v2132, 0
    %v2145 = vsel %vm447, %v2133, 0
    %2147 = vmatprep.subr.mxu0 0.0
    %2148 = vmatpush1.msra.mxu0 %v2134
    %2149 = vmatprep.subr.mxu0 0.0
    %2150 = vmatpush1.msra.mxu0 0.0
    %2151 = vmatprep.subr.mxu0 0.0
    %2152 = vmatpush1.msra.mxu0 0.0
    %2153 = vmatprep.subr.mxu0 0.0
    %2154 = vmatpush1.msra.mxu0 0.0
    %2155 = vmatprep.subr.mxu0 0.0
    %2156 = vmatpush1.msra.mxu0 0.0
    %2157 = vmatprep.subr.mxu0 0.0
    %2158 = vmatpush1.msra.mxu0 0.0
    %2159 = vmatprep.subr.mxu0 0.0
    %2160 = vmatpush1.msra.mxu0 0.0
    %2161 = vmatprep.subr.mxu0 0.0
    %2162 = vmatpush1.msra.mxu0 0.0
    %2163 = vmatprep.subr.mxu0 0.0
    %2164 = vmatpush1.msra.mxu0 0.0
    %2165 = vmatprep.subr.mxu0 0.0
    %2166 = vmatpush1.msra.mxu0 0.0
    %2167 = vmatprep.subr.mxu0 0.0
    %2168 = vmatpush1.msra.mxu0 0.0
    %2169 = vmatprep.subr.mxu0 0.0
    %2170 = vmatpush1.msra.mxu0 0.0
    %2171 = vmatprep.subr.mxu0 0.0
    %2172 = vmatpush1.msra.mxu0 0.0
    %2173 = vmatprep.subr.mxu0 0.0
    %2174 = vmatpush1.msra.mxu0 0.0
    %2175 = vmatprep.subr.mxu0 0.0
    %2176 = vmatpush1.msra.mxu0 0.0
    %2177 = vmatprep.subr.mxu0 0.0
    %2178 = vmatpush1.msra.mxu0 0.0
    %2179 = vmatprep.subr.mxu0 0.0
    %2180 = vmatpush1.msra.mxu0 0.0
    %2181 = vmatprep.subr.mxu0 0.0
    %2182 = vmatpush1.msra.mxu0 0.0
    %2183 = vmatprep.subr.mxu0 0.0
    %2184 = vmatpush1.msra.mxu0 0.0
    %2185 = vmatprep.subr.mxu0 0.0
    %2186 = vmatpush1.msra.mxu0 0.0
    %2187 = vmatprep.subr.mxu0 0.0
    %2188 = vmatpush1.msra.mxu0 0.0
    %2189 = vmatprep.subr.mxu0 0.0
    %2190 = vmatpush1.msra.mxu0 0.0
    %2191 = vmatprep.subr.mxu0 0.0
    %2192 = vmatpush1.msra.mxu0 0.0
    %2193 = vmatprep.subr.mxu0 0.0
    %2194 = vmatpush1.msra.mxu0 0.0
    %2195 = vmatprep.subr.mxu0 0.0
    %2196 = vmatpush1.msra.mxu0 0.0
    %2197 = vmatprep.subr.mxu0 0.0
    %2198 = vmatpush1.msra.mxu0 0.0
    %2199 = vmatprep.subr.mxu0 0.0
    %2200 = vmatpush1.msra.mxu0 0.0
    %2201 = vmatprep.subr.mxu0 0.0
    %2202 = vmatpush1.msra.mxu0 0.0
    %2203 = vmatprep.subr.mxu0 0.0
    %2204 = vmatpush1.msra.mxu0 0.0
    %2205 = vmatprep.subr.mxu0 0.0
    %2206 = vmatpush1.msra.mxu0 0.0
    %2207 = vmatprep.subr.mxu0 0.0
    %2208 = vmatpush1.msra.mxu0 0.0
    %2209 = vmatprep.subr.mxu0 0.0
    %2210 = vmatpush1.msra.mxu0 0.0
    %2211 = vmatprep.mubr.f32.mxu0 0.0
    %2212 = vmatmul.mubr.f32.gmra.mrb[0].mxu0 %v2136
    %v2213 = vpop.f32.mrb[0].mxu0
    %v2214 = vadd.f32 0.0, %v2213
    %v2215 = vpop.f32.mrb[0].mxu0
    %2216 = vmatprep.mubr.f32.mxu0 0.0
    %2217 = vmatmul.mubr.f32.gmra.mrb[0].mxu0 %v2139
    %v2218 = vpop.f32.mrb[0].mxu0
    %v2219 = vadd.f32 0.0, %v2218
    %v2220 = vpop.f32.mrb[0].mxu0
    %2221 = vmatprep.mubr.f32.mxu0 0.0
    %2222 = vmatmul.mubr.f32.gmra.mrb[0].mxu0 %v2142
    %v2223 = vpop.f32.mrb[0].mxu0
    %v2224 = vadd.f32 0.0, %v2223
    %v2225 = vpop.f32.mrb[0].mxu0
    %2226 = vmatprep.mubr.f32.mxu0 0.0
    %2227 = vmatmul.mubr.f32.gmra.mrb[0].mxu0 %v2145
    %v2228 = vpop.f32.mrb[0].mxu0
    %v2229 = vadd.f32 0.0, %v2228
    %v2230 = vpop.f32.mrb[0].mxu0
    %2231 = vdwg.mxu0
    %2232 = vst.msk [vmem:[#allocation11] sm:$0xff] %vm129, %v2214
    %2233 = vst.msk [vmem:[#allocation11 + $0x8] sm:$0xff] %vm129, %v2219
    %2234 = vst.msk [vmem:[#allocation11 + $0x10] sm:$0xff] %vm129, %v2224
    %2235 = vst.msk [vmem:[#allocation11 + $0x18] sm:$0xff] %vm129, %v2229
    // Predicated region
    $region62: #{interpretable_mha.1} parent=1 // pred_check
      _
    $region63: #{interpretable_mha.1} parent=1 // pred_check_branch
      %2237 = sbr.rel (0) target = $region65
    $region64: #{interpretable_mha.1} parent=1 // pred_region
      %s2239 = ssub.s32 512, 512
      %2240 = vsyncadd [#allocation4], %s2239
      %s2241 = sshll.u32 [#allocation11], 4
      %s2242 = int_to_ptr.vmem [resolvable:$true] %s2241
      %2247 = dma.vmem_to_hbm [thread:$0]  %s2242, 512, %s10, [#allocation4], 128, 128, 8
    $region65: #{interpretable_mha.1} parent=1 // pred_fallthru
      _
    // Predicated region
    $region66: #{interpretable_mha.1} parent=1 // pred_check
      _
    $region67: #{interpretable_mha.1} parent=1 // pred_check_branch
      %2249 = sbr.rel (0) target = $region69
    $region68: #{interpretable_mha.1} parent=1 // pred_region
      _
    $region69: #{interpretable_mha.1} parent=1 // pred_fallthru
      _
    // Predicated region
    $region70: #{interpretable_mha.1} parent=1 // pred_check
      _
    $region71: #{interpretable_mha.1} parent=1 // pred_check_branch
      %2251 = sbr.rel (0) target = $region73
    $region72: #{interpretable_mha.1} parent=1 // pred_region
      %2252 = dma.done [#allocation4], 512
    $region73: #{interpretable_mha.1} parent=1 // pred_fallthru
      _
    // Predicated region
    $region74: #{interpretable_mha.1} parent=1 // pred_check
      _
    $region75: #{interpretable_mha.1} parent=1 // pred_check_branch
      %2254 = sbr.rel (0) target = $region77
    $region76: #{interpretable_mha.1} parent=1 // pred_region
      _
    $region77: #{interpretable_mha.1} parent=1 // pred_fallthru
      _
    %2255 = vsyncpa [#allocation3], 1
    %2256 = vsyncpa [#allocation6], 1
    %2257 = vsyncpa [#allocation9], 1
    %2258 = vsyncpa [#allocation4], 1

</llo_original>
